<compile_context>
chip_gen: v5e
topology: v5e:2x2
jax: 0.10.0
libtpu: 0.0.40
codegen_flags: <defaults>
</compile_context>

<pallas_src>
import functools

import numpy as np

import jax
import jax.numpy as jnp
from jax.experimental import pallas as pl
from jax.experimental.pallas import tpu as pltpu

# Model hyper-parameters (small shapes consistent with the module).
B = 2            # batch
SEQ_LEN = 16     # seq_length (divides evenly through the two maxpools)
C1 = 32          # conv1 out channels
C2 = 64          # conv2 out channels
H = 128          # LSTM hidden size
NUM_CLASSES = 2
OUT_PAD = 128    # fc output padded to a full lane width

L1 = SEQ_LEN          # after conv1
L2 = SEQ_LEN // 2     # after pool1
L3 = SEQ_LEN // 4     # after pool2 (LSTM time steps)


def _sigmoid_kernel(v):
    # sigmoid(x) == 0.5 * (tanh(x/2) + 1): EUP tanh, no divide on the recurrence.
    return 0.5 * (jnp.tanh(0.5 * v) + 1.0)


def _sigmoid_ref(v):
    return 1.0 / (1.0 + jnp.exp(-v))


def clatnet_kernel(patch_ref, se1_ref, so1_ref, se2_ref, so2_ref,
                   w1_ref, b1_ref, w2_ref, b2_ref,
                   wih_ref, whh_ref, bl_ref, wfc_ref, bfc_ref,
                   out_ref, *, batch, l2, l3):
    f32 = jnp.float32
    bl2 = batch * l2

    # ---- conv1 (in=1, out=32, k=3, pad=1) + ReLU : (B*L1,3) @ (3,C1) ---------
    c1 = jnp.dot(patch_ref[...], w1_ref[...], preferred_element_type=f32) + b1_ref[...]
    c1 = jnp.maximum(c1, 0.0)                                          # (B*L1, C1)

    # ---- maxpool1 fused with conv2 window extraction -------------------------
    # wins[k*B*L2 + b*L2 + t] = maxpool1(c1)[b, t+k-1]  (zero rows at conv edges)
    # se1/so1 are baked 0/1 matrices selecting the even/odd element of each pool
    # pair for every (k, b, t); a single elementwise max finishes the pooling.
    wins = jnp.maximum(
        jnp.dot(se1_ref[...], c1, preferred_element_type=f32),
        jnp.dot(so1_ref[...], c1, preferred_element_type=f32))         # (3*B*L2, C1)

    # ---- conv2 (in=32, out=64, k=3, pad=1) + ReLU ----------------------------
    c2 = b2_ref[...]
    for k in range(3):
        c2 = c2 + jnp.dot(wins[k * bl2:(k + 1) * bl2, :], w2_ref[k],
                          preferred_element_type=f32)
    c2 = jnp.maximum(c2, 0.0)                                          # (B*L2, C2)

    # ---- maxpool2 + reorder rows to time-major (row = t*B + b) ---------------
    p2 = jnp.maximum(
        jnp.dot(se2_ref[...], c2, preferred_element_type=f32),
        jnp.dot(so2_ref[...], c2, preferred_element_type=f32))         # (B*L3, C2)

    # ---- LSTM (input=64, hidden=128, batch_first) ----------------------------
    # Hoisted input projection: one (B*L3, 4H) matmul outside the recurrence.
    x_proj = jnp.dot(p2, wih_ref[...], preferred_element_type=f32) + bl_ref[...]
    whh = whh_ref[...]                                                 # (H, 4H)
    h = jnp.zeros((batch, H), f32)
    cst = jnp.zeros((batch, H), f32)
    for t in range(l3):
        gates = (x_proj[t * batch:(t + 1) * batch, :]
                 + jnp.dot(h, whh, preferred_element_type=f32))        # (B, 4H)
        i_g = _sigmoid_kernel(gates[:, 0:H])
        f_g = _sigmoid_kernel(gates[:, H:2 * H])
        g_g = jnp.tanh(gates[:, 2 * H:3 * H])
        o_g = _sigmoid_kernel(gates[:, 3 * H:4 * H])
        cst = f_g * cst + i_g * g_g
        h = o_g * jnp.tanh(cst)

    # ---- dropout(0.5): identity (eval mode) ----------------------------------
    # TODO(synk): training-mode dropout (Bernoulli mask via pltpu.prng_*) not applied.

    # ---- fc: Linear(128 -> num_classes), output lane-padded to 128 -----------
    out_ref[...] = jnp.dot(h, wfc_ref[...], preferred_element_type=f32) + bfc_ref[...]


def _build_selectors(batch, l1, l2, l3):
    """Compile-time 0/1 selection matrices (numpy, baked as kernel inputs)."""
    # Pool1 + conv2 window extraction: output row q = k*(B*L2) + b*L2 + t selects
    # the even/odd member of pool pair (t + k - 1) of example b (zero if OOB).
    se1 = np.zeros((3 * batch * l2, batch * l1), np.float32)
    so1 = np.zeros((3 * batch * l2, batch * l1), np.float32)
    for k in range(3):
        for b in range(batch):
            for t in range(l2):
                src = t + k - 1
                if 0 <= src < l2:
                    q = k * (batch * l2) + b * l2 + t
                    se1[q, b * l1 + 2 * src] = 1.0
                    so1[q, b * l1 + 2 * src + 1] = 1.0
    # Pool2 + reorder to time-major: output row m = t*B + b.
    se2 = np.zeros((batch * l3, batch * l2), np.float32)
    so2 = np.zeros((batch * l3, batch * l2), np.float32)
    for t in range(l3):
        for b in range(batch):
            m = t * batch + b
            se2[m, b * l2 + 2 * t] = 1.0
            so2[m, b * l2 + 2 * t + 1] = 1.0
    return se1, so1, se2, so2


def clatnet_forward(x, p):
    """x: (B, SEQ_LEN, 1) float32 -> logits (B, NUM_CLASSES)."""
    Bx, L, _ = x.shape
    l2, l3 = L // 2, L // 4

    # glue: zero-pad time per example and build conv1 im2col patches (B*L, 3),
    # rows batch-major (b*L + t).
    xp = jnp.pad(x[:, :, 0], ((0, 0), (1, 1)))
    patches = jnp.stack([xp[:, k:k + L] for k in range(3)], axis=-1)
    patches = patches.reshape(Bx * L, 3).astype(jnp.float32)

    se1, so1, se2, so2 = _build_selectors(Bx, L, l2, l3)

    kernel = functools.partial(clatnet_kernel, batch=Bx, l2=l2, l3=l3)
    out = pl.pallas_call(
        kernel,
        out_shape=jax.ShapeDtypeStruct((Bx, OUT_PAD), jnp.float32),
        grid=(1,),
        in_specs=[
            pl.BlockSpec((Bx * L, 3), lambda i: (0, 0)),             # conv1 patches
            pl.BlockSpec((3 * Bx * l2, Bx * L), lambda i: (0, 0)),   # pool1/window sel (even)
            pl.BlockSpec((3 * Bx * l2, Bx * L), lambda i: (0, 0)),   # pool1/window sel (odd)
            pl.BlockSpec((Bx * l3, Bx * l2), lambda i: (0, 0)),      # pool2 sel (even)
            pl.BlockSpec((Bx * l3, Bx * l2), lambda i: (0, 0)),      # pool2 sel (odd)
            pl.BlockSpec((3, C1), lambda i: (0, 0)),                 # w1
            pl.BlockSpec((1, C1), lambda i: (0, 0)),                 # b1
            pl.BlockSpec((3, C1, C2), lambda i: (0, 0, 0)),          # w2
            pl.BlockSpec((1, C2), lambda i: (0, 0)),                 # b2
            pl.BlockSpec((C2, 4 * H), lambda i: (0, 0)),             # W_ih^T
            pl.BlockSpec((H, 4 * H), lambda i: (0, 0)),              # W_hh^T
            pl.BlockSpec((1, 4 * H), lambda i: (0, 0)),              # b_ih + b_hh
            pl.BlockSpec((H, OUT_PAD), lambda i: (0, 0)),            # fc weight (padded)
            pl.BlockSpec((1, OUT_PAD), lambda i: (0, 0)),            # fc bias (padded)
        ],
        out_specs=pl.BlockSpec((Bx, OUT_PAD), lambda i: (0, 0)),
        compiler_params=pltpu.CompilerParams(
            dimension_semantics=("arbitrary",)),
    )(patches, se1, so1, se2, so2,
      p["w1"], p["b1"], p["w2"], p["b2"],
      p["wih"], p["whh"], p["bl"], p["wfc"], p["bfc"])

    return out[:, :NUM_CLASSES]


def reference_forward(x, p):
    """Pure-JAX reference with identical math/layout."""
    Bx, L, _ = x.shape
    xp = jnp.pad(x[:, :, 0], ((0, 0), (1, 1)))
    patches = jnp.stack([xp[:, k:k + L] for k in range(3)], axis=-1)
    c1 = jnp.maximum(jnp.einsum("blk,ko->blo", patches, p["w1"]) + p["b1"], 0.0)
    p1 = jnp.max(c1.reshape(Bx, L // 2, 2, C1), axis=2)
    p1p = jnp.pad(p1, ((0, 0), (1, 1), (0, 0)))
    c2 = jnp.zeros((Bx, L // 2, C2), jnp.float32) + p["b2"]
    for k in range(3):
        c2 = c2 + jnp.einsum("blc,co->blo", p1p[:, k:k + L // 2, :], p["w2"][k])
    c2 = jnp.maximum(c2, 0.0)
    p2 = jnp.max(c2.reshape(Bx, L // 4, 2, C2), axis=2)
    h = jnp.zeros((Bx, H), jnp.float32)
    c = jnp.zeros((Bx, H), jnp.float32)
    for t in range(L // 4):
        g = p2[:, t, :] @ p["wih"] + h @ p["whh"] + p["bl"]
        i_g = _sigmoid_ref(g[:, 0:H])
        f_g = _sigmoid_ref(g[:, H:2 * H])
        g_g = jnp.tanh(g[:, 2 * H:3 * H])
        o_g = _sigmoid_ref(g[:, 3 * H:4 * H])
        c = f_g * c + i_g * g_g
        h = o_g * jnp.tanh(c)
    out = h @ p["wfc"] + p["bfc"]
    return out[:, :NUM_CLASSES]


def init_params(key):
    ks = jax.random.split(key, 10)
    wfc = jax.random.normal(ks[8], (H, NUM_CLASSES), jnp.float32) * 0.1
    bfc = jax.random.normal(ks[9], (1, NUM_CLASSES), jnp.float32) * 0.1
    return {
        "w1": jax.random.normal(ks[0], (3, C1), jnp.float32) * 0.4,          # conv1 weight[o,0,k] -> [k,o]
        "b1": jax.random.normal(ks[1], (1, C1), jnp.float32) * 0.1,
        "w2": jax.random.normal(ks[2], (3, C1, C2), jnp.float32) * 0.1,      # conv2 weight[o,c,k] -> [k,c,o]
        "b2": jax.random.normal(ks[3], (1, C2), jnp.float32) * 0.1,
        "wih": jax.random.normal(ks[4], (C2, 4 * H), jnp.float32) * 0.1,     # W_ih^T, gate order i,f,g,o
        "whh": jax.random.normal(ks[5], (H, 4 * H), jnp.float32) * 0.08,     # W_hh^T
        "bl": jax.random.normal(ks[6], (1, 4 * H), jnp.float32) * 0.1,       # b_ih + b_hh
        "wfc": jnp.pad(wfc, ((0, 0), (0, OUT_PAD - NUM_CLASSES))),           # fc W^T lane-padded
        "bfc": jnp.pad(bfc, ((0, 0), (0, OUT_PAD - NUM_CLASSES))),
    }


if __name__ == "__main__":
    key = jax.random.PRNGKey(0)
    k_x, k_p = jax.random.split(key)
    params = init_params(k_p)
    x = jax.random.normal(k_x, (B, SEQ_LEN, 1), jnp.float32)

    y = clatnet_forward(x, params)
    y = jax.block_until_ready(y)

    y_ref = jax.block_until_ready(reference_forward(x, params))
    assert y.shape == (B, NUM_CLASSES), y.shape
    assert jnp.allclose(y, y_ref, rtol=2e-3, atol=2e-3), (y, y_ref)

    print("KERNEL_OK")
</pallas_src>

<mosaic_0001>
module attributes {stable_mosaic.version = 11 : i64} {
  func.func @clatnet_kernel(%arg0: i32, %arg1: memref<32x3xf32, #tpu.memory_space<vmem>>, %arg2: memref<48x32xf32, #tpu.memory_space<vmem>>, %arg3: memref<48x32xf32, #tpu.memory_space<vmem>>, %arg4: memref<8x16xf32, #tpu.memory_space<vmem>>, %arg5: memref<8x16xf32, #tpu.memory_space<vmem>>, %arg6: memref<3x32xf32, #tpu.memory_space<vmem>>, %arg7: memref<1x32xf32, #tpu.memory_space<vmem>>, %arg8: memref<3x32x64xf32, #tpu.memory_space<vmem>>, %arg9: memref<1x64xf32, #tpu.memory_space<vmem>>, %arg10: memref<64x512xf32, #tpu.memory_space<vmem>>, %arg11: memref<128x512xf32, #tpu.memory_space<vmem>>, %arg12: memref<1x512xf32, #tpu.memory_space<vmem>>, %arg13: memref<128x128xf32, #tpu.memory_space<vmem>>, %arg14: memref<1x128xf32, #tpu.memory_space<vmem>>, %arg15: memref<2x128xf32, #tpu.memory_space<vmem>>) attributes {dimension_semantics = [#tpu.dimension_semantics<arbitrary>], iteration_bounds = array<i64: 1>, scalar_prefetch = 0 : i64, scratch_operands = 0 : i64, tpu.core_type = #tpu.core_type<tc>, window_params = [{pipeline_mode = #tpu.pipeline_mode<synchronous>, transform_indices = @transform_0, window_bounds = array<i64: 32, 3>}, {pipeline_mode = #tpu.pipeline_mode<synchronous>, transform_indices = @transform_1, window_bounds = array<i64: 48, 32>}, {pipeline_mode = #tpu.pipeline_mode<synchronous>, transform_indices = @transform_2, window_bounds = array<i64: 48, 32>}, {pipeline_mode = #tpu.pipeline_mode<synchronous>, transform_indices = @transform_3, window_bounds = array<i64: 8, 16>}, {pipeline_mode = #tpu.pipeline_mode<synchronous>, transform_indices = @transform_4, window_bounds = array<i64: 8, 16>}, {pipeline_mode = #tpu.pipeline_mode<synchronous>, transform_indices = @transform_5, window_bounds = array<i64: 3, 32>}, {pipeline_mode = #tpu.pipeline_mode<synchronous>, transform_indices = @transform_6, window_bounds = array<i64: 1, 32>}, {pipeline_mode = #tpu.pipeline_mode<synchronous>, transform_indices = @transform_7, window_bounds = array<i64: 3, 32, 64>}, {pipeline_mode = #tpu.pipeline_mode<synchronous>, transform_indices = @transform_8, window_bounds = array<i64: 1, 64>}, {pipeline_mode = #tpu.pipeline_mode<synchronous>, transform_indices = @transform_9, window_bounds = array<i64: 64, 512>}, {pipeline_mode = #tpu.pipeline_mode<synchronous>, transform_indices = @transform_10, window_bounds = array<i64: 128, 512>}, {pipeline_mode = #tpu.pipeline_mode<synchronous>, transform_indices = @transform_11, window_bounds = array<i64: 1, 512>}, {pipeline_mode = #tpu.pipeline_mode<synchronous>, transform_indices = @transform_12, window_bounds = array<i64: 128, 128>}, {pipeline_mode = #tpu.pipeline_mode<synchronous>, transform_indices = @transform_13, window_bounds = array<i64: 1, 128>}, {pipeline_mode = #tpu.pipeline_mode<synchronous>, transform_indices = @transform_14, window_bounds = array<i64: 2, 128>}]} {
    %c0 = arith.constant 0 : index
    %c0_0 = arith.constant 0 : index
    %0 = vector.load %arg1[%c0, %c0_0] : memref<32x3xf32, #tpu.memory_space<vmem>>, vector<32x3xf32>
    %c0_1 = arith.constant 0 : index
    %c0_2 = arith.constant 0 : index
    %1 = vector.load %arg6[%c0_1, %c0_2] : memref<3x32xf32, #tpu.memory_space<vmem>>, vector<3x32xf32>
    %cst = arith.constant dense<0.000000e+00> : vector<32x32xf32>
    %2 = tpu.matmul %0, %1, %cst {dimension_numbers = #tpu.dot_dimension_numbers<[1], [0], [0], [1], [0, 0, 1, 1], [], []>} : vector<32x3xf32>, vector<3x32xf32>, vector<32x32xf32> -> vector<32x32xf32>
    %c0_3 = arith.constant 0 : index
    %c0_4 = arith.constant 0 : index
    %3 = vector.load %arg7[%c0_3, %c0_4] : memref<1x32xf32, #tpu.memory_space<vmem>>, vector<1x32xf32>
    %4 = vector.broadcast %3 : vector<1x32xf32> to vector<32x32xf32>
    %5 = arith.addf %2, %4 : vector<32x32xf32>
    %cst_5 = arith.constant 0.000000e+00 : f32
    %6 = vector.broadcast %cst_5 : f32 to vector<32x32xf32>
    %7 = arith.maximumf %5, %6 : vector<32x32xf32>
    %c0_6 = arith.constant 0 : index
    %c0_7 = arith.constant 0 : index
    %8 = vector.load %arg2[%c0_6, %c0_7] : memref<48x32xf32, #tpu.memory_space<vmem>>, vector<48x32xf32>
    %cst_8 = arith.constant dense<0.000000e+00> : vector<48x32xf32>
    %9 = tpu.matmul %8, %7, %cst_8 {dimension_numbers = #tpu.dot_dimension_numbers<[1], [0], [0], [1], [0, 0, 1, 1], [], []>} : vector<48x32xf32>, vector<32x32xf32>, vector<48x32xf32> -> vector<48x32xf32>
    %c0_9 = arith.constant 0 : index
    %c0_10 = arith.constant 0 : index
    %10 = vector.load %arg3[%c0_9, %c0_10] : memref<48x32xf32, #tpu.memory_space<vmem>>, vector<48x32xf32>
    %cst_11 = arith.constant dense<0.000000e+00> : vector<48x32xf32>
    %11 = tpu.matmul %10, %7, %cst_11 {dimension_numbers = #tpu.dot_dimension_numbers<[1], [0], [0], [1], [0, 0, 1, 1], [], []>} : vector<48x32xf32>, vector<32x32xf32>, vector<48x32xf32> -> vector<48x32xf32>
    %12 = arith.maximumf %9, %11 : vector<48x32xf32>
    %c0_12 = arith.constant 0 : index
    %c0_13 = arith.constant 0 : index
    %13 = vector.load %arg9[%c0_12, %c0_13] : memref<1x64xf32, #tpu.memory_space<vmem>>, vector<1x64xf32>
    %14 = vector.extract_strided_slice %12 {offsets = [0, 0], sizes = [16, 32], strides = [1, 1]} : vector<48x32xf32> to vector<16x32xf32>
    %c0_14 = arith.constant 0 : index
    %c0_15 = arith.constant 0 : index
    %c0_16 = arith.constant 0 : index
    %15 = vector.load %arg8[%c0_14, %c0_15, %c0_16] : memref<3x32x64xf32, #tpu.memory_space<vmem>>, vector<1x32x64xf32>
    %16 = vector.shape_cast %15 : vector<1x32x64xf32> to vector<32x64xf32>
    %cst_17 = arith.constant dense<0.000000e+00> : vector<16x64xf32>
    %17 = tpu.matmul %14, %16, %cst_17 {dimension_numbers = #tpu.dot_dimension_numbers<[1], [0], [0], [1], [0, 0, 1, 1], [], []>} : vector<16x32xf32>, vector<32x64xf32>, vector<16x64xf32> -> vector<16x64xf32>
    %18 = vector.broadcast %13 : vector<1x64xf32> to vector<16x64xf32>
    %19 = arith.addf %18, %17 : vector<16x64xf32>
    %20 = vector.extract_strided_slice %12 {offsets = [16, 0], sizes = [16, 32], strides = [1, 1]} : vector<48x32xf32> to vector<16x32xf32>
    %c1 = arith.constant 1 : index
    %c0_18 = arith.constant 0 : index
    %c0_19 = arith.constant 0 : index
    %21 = vector.load %arg8[%c1, %c0_18, %c0_19] : memref<3x32x64xf32, #tpu.memory_space<vmem>>, vector<1x32x64xf32>
    %22 = vector.shape_cast %21 : vector<1x32x64xf32> to vector<32x64xf32>
    %cst_20 = arith.constant dense<0.000000e+00> : vector<16x64xf32>
    %23 = tpu.matmul %20, %22, %cst_20 {dimension_numbers = #tpu.dot_dimension_numbers<[1], [0], [0], [1], [0, 0, 1, 1], [], []>} : vector<16x32xf32>, vector<32x64xf32>, vector<16x64xf32> -> vector<16x64xf32>
    %24 = arith.addf %19, %23 : vector<16x64xf32>
    %25 = vector.extract_strided_slice %12 {offsets = [32, 0], sizes = [16, 32], strides = [1, 1]} : vector<48x32xf32> to vector<16x32xf32>
    %c2 = arith.constant 2 : index
    %c0_21 = arith.constant 0 : index
    %c0_22 = arith.constant 0 : index
    %26 = vector.load %arg8[%c2, %c0_21, %c0_22] : memref<3x32x64xf32, #tpu.memory_space<vmem>>, vector<1x32x64xf32>
    %27 = vector.shape_cast %26 : vector<1x32x64xf32> to vector<32x64xf32>
    %cst_23 = arith.constant dense<0.000000e+00> : vector<16x64xf32>
    %28 = tpu.matmul %25, %27, %cst_23 {dimension_numbers = #tpu.dot_dimension_numbers<[1], [0], [0], [1], [0, 0, 1, 1], [], []>} : vector<16x32xf32>, vector<32x64xf32>, vector<16x64xf32> -> vector<16x64xf32>
    %29 = arith.addf %24, %28 : vector<16x64xf32>
    %cst_24 = arith.constant 0.000000e+00 : f32
    %30 = vector.broadcast %cst_24 : f32 to vector<16x64xf32>
    %31 = arith.maximumf %29, %30 : vector<16x64xf32>
    %c0_25 = arith.constant 0 : index
    %c0_26 = arith.constant 0 : index
    %32 = vector.load %arg4[%c0_25, %c0_26] : memref<8x16xf32, #tpu.memory_space<vmem>>, vector<8x16xf32>
    %cst_27 = arith.constant dense<0.000000e+00> : vector<8x64xf32>
    %33 = tpu.matmul %32, %31, %cst_27 {dimension_numbers = #tpu.dot_dimension_numbers<[1], [0], [0], [1], [0, 0, 1, 1], [], []>} : vector<8x16xf32>, vector<16x64xf32>, vector<8x64xf32> -> vector<8x64xf32>
    %c0_28 = arith.constant 0 : index
    %c0_29 = arith.constant 0 : index
    %34 = vector.load %arg5[%c0_28, %c0_29] : memref<8x16xf32, #tpu.memory_space<vmem>>, vector<8x16xf32>
    %cst_30 = arith.constant dense<0.000000e+00> : vector<8x64xf32>
    %35 = tpu.matmul %34, %31, %cst_30 {dimension_numbers = #tpu.dot_dimension_numbers<[1], [0], [0], [1], [0, 0, 1, 1], [], []>} : vector<8x16xf32>, vector<16x64xf32>, vector<8x64xf32> -> vector<8x64xf32>
    %36 = arith.maximumf %33, %35 : vector<8x64xf32>
    %c0_31 = arith.constant 0 : index
    %c0_32 = arith.constant 0 : index
    %37 = vector.load %arg10[%c0_31, %c0_32] : memref<64x512xf32, #tpu.memory_space<vmem>>, vector<64x512xf32>
    %cst_33 = arith.constant dense<0.000000e+00> : vector<8x512xf32>
    %38 = tpu.matmul %36, %37, %cst_33 {dimension_numbers = #tpu.dot_dimension_numbers<[1], [0], [0], [1], [0, 0, 1, 1], [], []>} : vector<8x64xf32>, vector<64x512xf32>, vector<8x512xf32> -> vector<8x512xf32>
    %c0_34 = arith.constant 0 : index
    %c0_35 = arith.constant 0 : index
    %39 = vector.load %arg12[%c0_34, %c0_35] : memref<1x512xf32, #tpu.memory_space<vmem>>, vector<1x512xf32>
    %40 = vector.broadcast %39 : vector<1x512xf32> to vector<8x512xf32>
    %41 = arith.addf %38, %40 : vector<8x512xf32>
    %c0_36 = arith.constant 0 : index
    %c0_37 = arith.constant 0 : index
    %42 = vector.load %arg11[%c0_36, %c0_37] : memref<128x512xf32, #tpu.memory_space<vmem>>, vector<128x512xf32>
    %cst_38 = arith.constant 0.000000e+00 : f32
    %43 = vector.broadcast %cst_38 : f32 to vector<2x128xf32>
    %cst_39 = arith.constant 0.000000e+00 : f32
    %44 = vector.broadcast %cst_39 : f32 to vector<2x128xf32>
    %45 = vector.extract_strided_slice %41 {offsets = [0, 0], sizes = [2, 512], strides = [1, 1]} : vector<8x512xf32> to vector<2x512xf32>
    %cst_40 = arith.constant dense<0.000000e+00> : vector<2x512xf32>
    %46 = tpu.matmul %43, %42, %cst_40 {dimension_numbers = #tpu.dot_dimension_numbers<[1], [0], [0], [1], [0, 0, 1, 1], [], []>} : vector<2x128xf32>, vector<128x512xf32>, vector<2x512xf32> -> vector<2x512xf32>
    %47 = arith.addf %45, %46 : vector<2x512xf32>
    %48 = vector.extract_strided_slice %47 {offsets = [0, 0], sizes = [2, 128], strides = [1, 1]} : vector<2x512xf32> to vector<2x128xf32>
    %cst_41 = arith.constant 5.000000e-01 : f32
    %49 = vector.broadcast %cst_41 : f32 to vector<2x128xf32>
    %50 = arith.mulf %49, %48 : vector<2x128xf32>
    %51 = math.tanh %50 : vector<2x128xf32>
    %cst_42 = arith.constant 1.000000e+00 : f32
    %52 = vector.broadcast %cst_42 : f32 to vector<2x128xf32>
    %53 = arith.addf %51, %52 : vector<2x128xf32>
    %cst_43 = arith.constant 5.000000e-01 : f32
    %54 = vector.broadcast %cst_43 : f32 to vector<2x128xf32>
    %55 = arith.mulf %54, %53 : vector<2x128xf32>
    %56 = vector.extract_strided_slice %47 {offsets = [0, 128], sizes = [2, 128], strides = [1, 1]} : vector<2x512xf32> to vector<2x128xf32>
    %cst_44 = arith.constant 5.000000e-01 : f32
    %57 = vector.broadcast %cst_44 : f32 to vector<2x128xf32>
    %58 = arith.mulf %57, %56 : vector<2x128xf32>
    %59 = math.tanh %58 : vector<2x128xf32>
    %cst_45 = arith.constant 1.000000e+00 : f32
    %60 = vector.broadcast %cst_45 : f32 to vector<2x128xf32>
    %61 = arith.addf %59, %60 : vector<2x128xf32>
    %cst_46 = arith.constant 5.000000e-01 : f32
    %62 = vector.broadcast %cst_46 : f32 to vector<2x128xf32>
    %63 = arith.mulf %62, %61 : vector<2x128xf32>
    %64 = vector.extract_strided_slice %47 {offsets = [0, 256], sizes = [2, 128], strides = [1, 1]} : vector<2x512xf32> to vector<2x128xf32>
    %65 = math.tanh %64 : vector<2x128xf32>
    %66 = vector.extract_strided_slice %47 {offsets = [0, 384], sizes = [2, 128], strides = [1, 1]} : vector<2x512xf32> to vector<2x128xf32>
    %cst_47 = arith.constant 5.000000e-01 : f32
    %67 = vector.broadcast %cst_47 : f32 to vector<2x128xf32>
    %68 = arith.mulf %67, %66 : vector<2x128xf32>
    %69 = math.tanh %68 : vector<2x128xf32>
    %cst_48 = arith.constant 1.000000e+00 : f32
    %70 = vector.broadcast %cst_48 : f32 to vector<2x128xf32>
    %71 = arith.addf %69, %70 : vector<2x128xf32>
    %cst_49 = arith.constant 5.000000e-01 : f32
    %72 = vector.broadcast %cst_49 : f32 to vector<2x128xf32>
    %73 = arith.mulf %72, %71 : vector<2x128xf32>
    %74 = arith.mulf %63, %44 : vector<2x128xf32>
    %75 = arith.mulf %55, %65 : vector<2x128xf32>
    %76 = arith.addf %74, %75 : vector<2x128xf32>
    %77 = math.tanh %76 : vector<2x128xf32>
    %78 = arith.mulf %73, %77 : vector<2x128xf32>
    %79 = vector.extract_strided_slice %41 {offsets = [2, 0], sizes = [2, 512], strides = [1, 1]} : vector<8x512xf32> to vector<2x512xf32>
    %cst_50 = arith.constant dense<0.000000e+00> : vector<2x512xf32>
    %80 = tpu.matmul %78, %42, %cst_50 {dimension_numbers = #tpu.dot_dimension_numbers<[1], [0], [0], [1], [0, 0, 1, 1], [], []>} : vector<2x128xf32>, vector<128x512xf32>, vector<2x512xf32> -> vector<2x512xf32>
    %81 = arith.addf %79, %80 : vector<2x512xf32>
    %82 = vector.extract_strided_slice %81 {offsets = [0, 0], sizes = [2, 128], strides = [1, 1]} : vector<2x512xf32> to vector<2x128xf32>
    %cst_51 = arith.constant 5.000000e-01 : f32
    %83 = vector.broadcast %cst_51 : f32 to vector<2x128xf32>
    %84 = arith.mulf %83, %82 : vector<2x128xf32>
    %85 = math.tanh %84 : vector<2x128xf32>
    %cst_52 = arith.constant 1.000000e+00 : f32
    %86 = vector.broadcast %cst_52 : f32 to vector<2x128xf32>
    %87 = arith.addf %85, %86 : vector<2x128xf32>
    %cst_53 = arith.constant 5.000000e-01 : f32
    %88 = vector.broadcast %cst_53 : f32 to vector<2x128xf32>
    %89 = arith.mulf %88, %87 : vector<2x128xf32>
    %90 = vector.extract_strided_slice %81 {offsets = [0, 128], sizes = [2, 128], strides = [1, 1]} : vector<2x512xf32> to vector<2x128xf32>
    %cst_54 = arith.constant 5.000000e-01 : f32
    %91 = vector.broadcast %cst_54 : f32 to vector<2x128xf32>
    %92 = arith.mulf %91, %90 : vector<2x128xf32>
    %93 = math.tanh %92 : vector<2x128xf32>
    %cst_55 = arith.constant 1.000000e+00 : f32
    %94 = vector.broadcast %cst_55 : f32 to vector<2x128xf32>
    %95 = arith.addf %93, %94 : vector<2x128xf32>
    %cst_56 = arith.constant 5.000000e-01 : f32
    %96 = vector.broadcast %cst_56 : f32 to vector<2x128xf32>
    %97 = arith.mulf %96, %95 : vector<2x128xf32>
    %98 = vector.extract_strided_slice %81 {offsets = [0, 256], sizes = [2, 128], strides = [1, 1]} : vector<2x512xf32> to vector<2x128xf32>
    %99 = math.tanh %98 : vector<2x128xf32>
    %100 = vector.extract_strided_slice %81 {offsets = [0, 384], sizes = [2, 128], strides = [1, 1]} : vector<2x512xf32> to vector<2x128xf32>
    %cst_57 = arith.constant 5.000000e-01 : f32
    %101 = vector.broadcast %cst_57 : f32 to vector<2x128xf32>
    %102 = arith.mulf %101, %100 : vector<2x128xf32>
    %103 = math.tanh %102 : vector<2x128xf32>
    %cst_58 = arith.constant 1.000000e+00 : f32
    %104 = vector.broadcast %cst_58 : f32 to vector<2x128xf32>
    %105 = arith.addf %103, %104 : vector<2x128xf32>
    %cst_59 = arith.constant 5.000000e-01 : f32
    %106 = vector.broadcast %cst_59 : f32 to vector<2x128xf32>
    %107 = arith.mulf %106, %105 : vector<2x128xf32>
    %108 = arith.mulf %97, %76 : vector<2x128xf32>
    %109 = arith.mulf %89, %99 : vector<2x128xf32>
    %110 = arith.addf %108, %109 : vector<2x128xf32>
    %111 = math.tanh %110 : vector<2x128xf32>
    %112 = arith.mulf %107, %111 : vector<2x128xf32>
    %113 = vector.extract_strided_slice %41 {offsets = [4, 0], sizes = [2, 512], strides = [1, 1]} : vector<8x512xf32> to vector<2x512xf32>
    %cst_60 = arith.constant dense<0.000000e+00> : vector<2x512xf32>
    %114 = tpu.matmul %112, %42, %cst_60 {dimension_numbers = #tpu.dot_dimension_numbers<[1], [0], [0], [1], [0, 0, 1, 1], [], []>} : vector<2x128xf32>, vector<128x512xf32>, vector<2x512xf32> -> vector<2x512xf32>
    %115 = arith.addf %113, %114 : vector<2x512xf32>
    %116 = vector.extract_strided_slice %115 {offsets = [0, 0], sizes = [2, 128], strides = [1, 1]} : vector<2x512xf32> to vector<2x128xf32>
    %cst_61 = arith.constant 5.000000e-01 : f32
    %117 = vector.broadcast %cst_61 : f32 to vector<2x128xf32>
    %118 = arith.mulf %117, %116 : vector<2x128xf32>
    %119 = math.tanh %118 : vector<2x128xf32>
    %cst_62 = arith.constant 1.000000e+00 : f32
    %120 = vector.broadcast %cst_62 : f32 to vector<2x128xf32>
    %121 = arith.addf %119, %120 : vector<2x128xf32>
    %cst_63 = arith.constant 5.000000e-01 : f32
    %122 = vector.broadcast %cst_63 : f32 to vector<2x128xf32>
    %123 = arith.mulf %122, %121 : vector<2x128xf32>
    %124 = vector.extract_strided_slice %115 {offsets = [0, 128], sizes = [2, 128], strides = [1, 1]} : vector<2x512xf32> to vector<2x128xf32>
    %cst_64 = arith.constant 5.000000e-01 : f32
    %125 = vector.broadcast %cst_64 : f32 to vector<2x128xf32>
    %126 = arith.mulf %125, %124 : vector<2x128xf32>
    %127 = math.tanh %126 : vector<2x128xf32>
    %cst_65 = arith.constant 1.000000e+00 : f32
    %128 = vector.broadcast %cst_65 : f32 to vector<2x128xf32>
    %129 = arith.addf %127, %128 : vector<2x128xf32>
    %cst_66 = arith.constant 5.000000e-01 : f32
    %130 = vector.broadcast %cst_66 : f32 to vector<2x128xf32>
    %131 = arith.mulf %130, %129 : vector<2x128xf32>
    %132 = vector.extract_strided_slice %115 {offsets = [0, 256], sizes = [2, 128], strides = [1, 1]} : vector<2x512xf32> to vector<2x128xf32>
    %133 = math.tanh %132 : vector<2x128xf32>
    %134 = vector.extract_strided_slice %115 {offsets = [0, 384], sizes = [2, 128], strides = [1, 1]} : vector<2x512xf32> to vector<2x128xf32>
    %cst_67 = arith.constant 5.000000e-01 : f32
    %135 = vector.broadcast %cst_67 : f32 to vector<2x128xf32>
    %136 = arith.mulf %135, %134 : vector<2x128xf32>
    %137 = math.tanh %136 : vector<2x128xf32>
    %cst_68 = arith.constant 1.000000e+00 : f32
    %138 = vector.broadcast %cst_68 : f32 to vector<2x128xf32>
    %139 = arith.addf %137, %138 : vector<2x128xf32>
    %cst_69 = arith.constant 5.000000e-01 : f32
    %140 = vector.broadcast %cst_69 : f32 to vector<2x128xf32>
    %141 = arith.mulf %140, %139 : vector<2x128xf32>
    %142 = arith.mulf %131, %110 : vector<2x128xf32>
    %143 = arith.mulf %123, %133 : vector<2x128xf32>
    %144 = arith.addf %142, %143 : vector<2x128xf32>
    %145 = math.tanh %144 : vector<2x128xf32>
    %146 = arith.mulf %141, %145 : vector<2x128xf32>
    %147 = vector.extract_strided_slice %41 {offsets = [6, 0], sizes = [2, 512], strides = [1, 1]} : vector<8x512xf32> to vector<2x512xf32>
    %cst_70 = arith.constant dense<0.000000e+00> : vector<2x512xf32>
    %148 = tpu.matmul %146, %42, %cst_70 {dimension_numbers = #tpu.dot_dimension_numbers<[1], [0], [0], [1], [0, 0, 1, 1], [], []>} : vector<2x128xf32>, vector<128x512xf32>, vector<2x512xf32> -> vector<2x512xf32>
    %149 = arith.addf %147, %148 : vector<2x512xf32>
    %150 = vector.extract_strided_slice %149 {offsets = [0, 0], sizes = [2, 128], strides = [1, 1]} : vector<2x512xf32> to vector<2x128xf32>
    %cst_71 = arith.constant 5.000000e-01 : f32
    %151 = vector.broadcast %cst_71 : f32 to vector<2x128xf32>
    %152 = arith.mulf %151, %150 : vector<2x128xf32>
    %153 = math.tanh %152 : vector<2x128xf32>
    %cst_72 = arith.constant 1.000000e+00 : f32
    %154 = vector.broadcast %cst_72 : f32 to vector<2x128xf32>
    %155 = arith.addf %153, %154 : vector<2x128xf32>
    %cst_73 = arith.constant 5.000000e-01 : f32
    %156 = vector.broadcast %cst_73 : f32 to vector<2x128xf32>
    %157 = arith.mulf %156, %155 : vector<2x128xf32>
    %158 = vector.extract_strided_slice %149 {offsets = [0, 128], sizes = [2, 128], strides = [1, 1]} : vector<2x512xf32> to vector<2x128xf32>
    %cst_74 = arith.constant 5.000000e-01 : f32
    %159 = vector.broadcast %cst_74 : f32 to vector<2x128xf32>
    %160 = arith.mulf %159, %158 : vector<2x128xf32>
    %161 = math.tanh %160 : vector<2x128xf32>
    %cst_75 = arith.constant 1.000000e+00 : f32
    %162 = vector.broadcast %cst_75 : f32 to vector<2x128xf32>
    %163 = arith.addf %161, %162 : vector<2x128xf32>
    %cst_76 = arith.constant 5.000000e-01 : f32
    %164 = vector.broadcast %cst_76 : f32 to vector<2x128xf32>
    %165 = arith.mulf %164, %163 : vector<2x128xf32>
    %166 = vector.extract_strided_slice %149 {offsets = [0, 256], sizes = [2, 128], strides = [1, 1]} : vector<2x512xf32> to vector<2x128xf32>
    %167 = math.tanh %166 : vector<2x128xf32>
    %168 = vector.extract_strided_slice %149 {offsets = [0, 384], sizes = [2, 128], strides = [1, 1]} : vector<2x512xf32> to vector<2x128xf32>
    %cst_77 = arith.constant 5.000000e-01 : f32
    %169 = vector.broadcast %cst_77 : f32 to vector<2x128xf32>
    %170 = arith.mulf %169, %168 : vector<2x128xf32>
    %171 = math.tanh %170 : vector<2x128xf32>
    %cst_78 = arith.constant 1.000000e+00 : f32
    %172 = vector.broadcast %cst_78 : f32 to vector<2x128xf32>
    %173 = arith.addf %171, %172 : vector<2x128xf32>
    %cst_79 = arith.constant 5.000000e-01 : f32
    %174 = vector.broadcast %cst_79 : f32 to vector<2x128xf32>
    %175 = arith.mulf %174, %173 : vector<2x128xf32>
    %176 = arith.mulf %165, %144 : vector<2x128xf32>
    %177 = arith.mulf %157, %167 : vector<2x128xf32>
    %178 = arith.addf %176, %177 : vector<2x128xf32>
    %179 = math.tanh %178 : vector<2x128xf32>
    %180 = arith.mulf %175, %179 : vector<2x128xf32>
    %c0_80 = arith.constant 0 : index
    %c0_81 = arith.constant 0 : index
    %181 = vector.load %arg13[%c0_80, %c0_81] : memref<128x128xf32, #tpu.memory_space<vmem>>, vector<128x128xf32>
    %cst_82 = arith.constant dense<0.000000e+00> : vector<2x128xf32>
    %182 = tpu.matmul %180, %181, %cst_82 {dimension_numbers = #tpu.dot_dimension_numbers<[1], [0], [0], [1], [0, 0, 1, 1], [], []>} : vector<2x128xf32>, vector<128x128xf32>, vector<2x128xf32> -> vector<2x128xf32>
    %c0_83 = arith.constant 0 : index
    %c0_84 = arith.constant 0 : index
    %183 = vector.load %arg14[%c0_83, %c0_84] : memref<1x128xf32, #tpu.memory_space<vmem>>, vector<1x128xf32>
    %184 = vector.broadcast %183 : vector<1x128xf32> to vector<2x128xf32>
    %185 = arith.addf %182, %184 : vector<2x128xf32>
    %c0_85 = arith.constant 0 : index
    %c0_86 = arith.constant 0 : index
    %186 = vector.load %arg15[%c0_85, %c0_86] : memref<2x128xf32, #tpu.memory_space<vmem>>, vector<2x128xf32>
    tpu.vector_store %arg15[%c0_85, %c0_86], %185 {strides = array<i32>} : memref<2x128xf32, #tpu.memory_space<vmem>>, vector<2x128xf32>,
    return
  }
  func.func @transform_0(%arg0: i32) -> (i32, i32) {
    %c0_i32 = arith.constant 0 : i32
    %c0_i32_0 = arith.constant 0 : i32
    %c0_i32_1 = arith.constant 0 : i32
    return %c0_i32, %c0_i32_0 : i32, i32
  }
  func.func @transform_1(%arg0: i32) -> (i32, i32) {
    %c0_i32 = arith.constant 0 : i32
    %c0_i32_0 = arith.constant 0 : i32
    %c0_i32_1 = arith.constant 0 : i32
    return %c0_i32, %c0_i32_0 : i32, i32
  }
  func.func @transform_2(%arg0: i32) -> (i32, i32) {
    %c0_i32 = arith.constant 0 : i32
    %c0_i32_0 = arith.constant 0 : i32
    %c0_i32_1 = arith.constant 0 : i32
    return %c0_i32, %c0_i32_0 : i32, i32
  }
  func.func @transform_3(%arg0: i32) -> (i32, i32) {
    %c0_i32 = arith.constant 0 : i32
    %c0_i32_0 = arith.constant 0 : i32
    %c0_i32_1 = arith.constant 0 : i32
    return %c0_i32, %c0_i32_0 : i32, i32
  }
  func.func @transform_4(%arg0: i32) -> (i32, i32) {
    %c0_i32 = arith.constant 0 : i32
    %c0_i32_0 = arith.constant 0 : i32
    %c0_i32_1 = arith.constant 0 : i32
    return %c0_i32, %c0_i32_0 : i32, i32
  }
  func.func @transform_5(%arg0: i32) -> (i32, i32) {
    %c0_i32 = arith.constant 0 : i32
    %c0_i32_0 = arith.constant 0 : i32
    %c0_i32_1 = arith.constant 0 : i32
    return %c0_i32, %c0_i32_0 : i32, i32
  }
  func.func @transform_6(%arg0: i32) -> (i32, i32) {
    %c0_i32 = arith.constant 0 : i32
    %c0_i32_0 = arith.constant 0 : i32
    %c0_i32_1 = arith.constant 0 : i32
    return %c0_i32, %c0_i32_0 : i32, i32
  }
  func.func @transform_7(%arg0: i32) -> (i32, i32, i32) {
    %c0_i32 = arith.constant 0 : i32
    %c0_i32_0 = arith.constant 0 : i32
    %c0_i32_1 = arith.constant 0 : i32
    %c0_i32_2 = arith.constant 0 : i32
    return %c0_i32, %c0_i32_0, %c0_i32_1 : i32, i32, i32
  }
  func.func @transform_8(%arg0: i32) -> (i32, i32) {
    %c0_i32 = arith.constant 0 : i32
    %c0_i32_0 = arith.constant 0 : i32
    %c0_i32_1 = arith.constant 0 : i32
    return %c0_i32, %c0_i32_0 : i32, i32
  }
  func.func @transform_9(%arg0: i32) -> (i32, i32) {
    %c0_i32 = arith.constant 0 : i32
    %c0_i32_0 = arith.constant 0 : i32
    %c0_i32_1 = arith.constant 0 : i32
    return %c0_i32, %c0_i32_0 : i32, i32
  }
  func.func @transform_10(%arg0: i32) -> (i32, i32) {
    %c0_i32 = arith.constant 0 : i32
    %c0_i32_0 = arith.constant 0 : i32
    %c0_i32_1 = arith.constant 0 : i32
    return %c0_i32, %c0_i32_0 : i32, i32
  }
  func.func @transform_11(%arg0: i32) -> (i32, i32) {
    %c0_i32 = arith.constant 0 : i32
    %c0_i32_0 = arith.constant 0 : i32
    %c0_i32_1 = arith.constant 0 : i32
    return %c0_i32, %c0_i32_0 : i32, i32
  }
  func.func @transform_12(%arg0: i32) -> (i32, i32) {
    %c0_i32 = arith.constant 0 : i32
    %c0_i32_0 = arith.constant 0 : i32
    %c0_i32_1 = arith.constant 0 : i32
    return %c0_i32, %c0_i32_0 : i32, i32
  }
  func.func @transform_13(%arg0: i32) -> (i32, i32) {
    %c0_i32 = arith.constant 0 : i32
    %c0_i32_0 = arith.constant 0 : i32
    %c0_i32_1 = arith.constant 0 : i32
    return %c0_i32, %c0_i32_0 : i32, i32
  }
  func.func @transform_14(%arg0: i32) -> (i32, i32) {
    %c0_i32 = arith.constant 0 : i32
    %c0_i32_0 = arith.constant 0 : i32
    %c0_i32_1 = arith.constant 0 : i32
    return %c0_i32, %c0_i32_0 : i32, i32
  }
}

</mosaic_0001>

<llo_original>
// kernel: tpu_custom_call.1
$region0: #{tpu_custom_call.1}
  #allocation0 [shape = 'u32[]', space=smem, size = 0x4, offset = 0x4, fixed_abs, tag = 'smem constant byte address 0x4 - core index']
  #allocation1 [shape = 'u32[72,128]{1,0:T(1,128)}', space=vmem, size = 0x9000, scoped, tag = 'internal scratch']
  %s0 = inlined_call_operand.vmem [shape: f32[32,3], index: 0, kind: input, shape index: {}]
  %s1 = inlined_call_operand.vmem [shape: f32[48,32], index: 1, kind: input, shape index: {}]
  %s2 = inlined_call_operand.vmem [shape: f32[48,32], index: 2, kind: input, shape index: {}]
  %s3 = inlined_call_operand.hbm [shape: f32[8,16], index: 3, kind: input, shape index: {}]
  %s4 = inlined_call_operand.hbm [shape: f32[8,16], index: 4, kind: input, shape index: {}]
  %s5 = inlined_call_operand.vmem [shape: f32[3,32], index: 5, kind: input, shape index: {}]
  %s6 = inlined_call_operand.vmem [shape: f32[1,32], index: 6, kind: input, shape index: {}]
  %s7 = inlined_call_operand.hbm [shape: f32[3,32,64], index: 7, kind: input, shape index: {}]
  %s8 = inlined_call_operand.hbm [shape: f32[1,64], index: 8, kind: input, shape index: {}]
  %s9 = inlined_call_operand.hbm [shape: f32[64,512], index: 9, kind: input, shape index: {}]
  %s10 = inlined_call_operand.hbm [shape: f32[128,512], index: 10, kind: input, shape index: {}]
  %s11 = inlined_call_operand.vmem [shape: f32[1,512], index: 11, kind: input, shape index: {}]
  %s12 = inlined_call_operand.vmem [shape: f32[128,128], index: 12, kind: input, shape index: {}]
  %s13 = inlined_call_operand.vmem [shape: f32[1,128], index: 13, kind: input, shape index: {}]
  %s14 = inlined_call_operand.hbm [shape: f32[2,128], index: 14, kind: output, shape index: {}]
  %s15 = sld [smem:[#allocation0]]
  $region90: #{tpu_custom_call.1} parent=0
    _
  %s17 = ssub.s32 1, %s15
  %s18 = scalar_select 0, %s17, %s15
  $region1: #{tpu_custom_call.1} parent=0
    #allocation2 [shape = 'u8[4096]{0}', space=vmem, size = 0x1000, scoped, tag = 'input window, operand 3, single buffered']
    #allocation3 [shape = 's32[1]{0}', space=sflag, size = 0x4, scoped, tag = 'scoped memory for tpu_custom_call.1']
    #allocation4 [shape = 's32[1]{0}', space=sflag, size = 0x4, scoped, tag = 'scoped memory for tpu_custom_call.1']
    #allocation5 [shape = 'u8[4096]{0}', space=vmem, size = 0x1000, scoped, tag = 'input window, operand 4, single buffered']
    #allocation6 [shape = 's32[1]{0}', space=sflag, size = 0x4, scoped, tag = 'scoped memory for tpu_custom_call.1']
    #allocation7 [shape = 'u8[49152]{0}', space=vmem, size = 0xc000, scoped, tag = 'input window, operand 7, single buffered']
    #allocation8 [shape = 'u8[512]{0}', space=vmem, size = 0x400, scoped, tag = 'input window, operand 8, single buffered']
    #allocation9 [shape = 's32[1]{0}', space=sflag, size = 0x4, scoped, tag = 'scoped memory for tpu_custom_call.1']
    #allocation10 [shape = 'u8[131072]{0}', space=vmem, size = 0x20000, scoped, tag = 'input window, operand 9, single buffered']
    #allocation11 [shape = 'u8[262144]{0}', space=vmem, size = 0x40000, scoped, tag = 'input window, operand 10, single buffered']
    #allocation12 [shape = 's32[1]{0}', space=sflag, size = 0x4, scoped, tag = 'scoped memory for tpu_custom_call.1']
    #allocation13 [shape = 'u8[1024]{0}', space=vmem, size = 0x400, scoped, tag = 'output window, operand 0, single buffered']
    %19 = vsyncpa [#allocation3], 0
    %20 = vsyncpa [#allocation6], 0
    %21 = vsyncpa [#allocation9], 0
    %22 = vsyncpa [#allocation12], 0
    %23 = vsyncpa [#allocation4], 0
    // Predicated region
    $region2: #{tpu_custom_call.1} parent=1 // pred_check
      _
    $region3: #{tpu_custom_call.1} parent=1 // pred_check_branch
      %25 = sbr.rel (0) target = $region5
    $region4: #{tpu_custom_call.1} parent=1 // pred_region
      _
    $region5: #{tpu_custom_call.1} parent=1 // pred_fallthru
      _
    // Predicated region
    $region6: #{tpu_custom_call.1} parent=1 // pred_check
      _
    $region7: #{tpu_custom_call.1} parent=1 // pred_check_branch
      %27 = sbr.rel (0) target = $region9
    $region8: #{tpu_custom_call.1} parent=1 // pred_region
      _
    $region9: #{tpu_custom_call.1} parent=1 // pred_fallthru
      _
    // Predicated region
    $region10: #{tpu_custom_call.1} parent=1 // pred_check
      _
    $region11: #{tpu_custom_call.1} parent=1 // pred_check_branch
      %29 = sbr.rel (0) target = $region13
    $region12: #{tpu_custom_call.1} parent=1 // pred_region
      _
    $region13: #{tpu_custom_call.1} parent=1 // pred_fallthru
      _
    // Predicated region
    $region14: #{tpu_custom_call.1} parent=1 // pred_check
      _
    $region15: #{tpu_custom_call.1} parent=1 // pred_check_branch
      %31 = sbr.rel (0) target = $region17
    $region16: #{tpu_custom_call.1} parent=1 // pred_region
      %33 = vsyncadd [#allocation3], 0
      %s35 = sshll.u32 %s3, 4
      %s36 = int_to_ptr.hbm [resolvable:$true] %s35
      %s37 = sshll.u32 [#allocation2], 4
      %s38 = int_to_ptr.vmem [resolvable:$true] %s37
      %40 = dma.hbm_to_vmem [thread:$0]  %s36, 128, %s38, [#allocation3]
    $region17: #{tpu_custom_call.1} parent=1 // pred_fallthru
      _
    // Predicated region
    $region18: #{tpu_custom_call.1} parent=1 // pred_check
      _
    $region19: #{tpu_custom_call.1} parent=1 // pred_check_branch
      %42 = sbr.rel (0) target = $region21
    $region20: #{tpu_custom_call.1} parent=1 // pred_region
      %44 = vsyncadd [#allocation6], 0
      %s46 = sshll.u32 %s4, 4
      %s47 = int_to_ptr.hbm [resolvable:$true] %s46
      %s48 = sshll.u32 [#allocation5], 4
      %s49 = int_to_ptr.vmem [resolvable:$true] %s48
      %51 = dma.hbm_to_vmem [thread:$0]  %s47, 128, %s49, [#allocation6]
    $region21: #{tpu_custom_call.1} parent=1 // pred_fallthru
      _
    // Predicated region
    $region22: #{tpu_custom_call.1} parent=1 // pred_check
      _
    $region23: #{tpu_custom_call.1} parent=1 // pred_check_branch
      %53 = sbr.rel (0) target = $region25
    $region24: #{tpu_custom_call.1} parent=1 // pred_region
      _
    $region25: #{tpu_custom_call.1} parent=1 // pred_fallthru
      _
    // Predicated region
    $region26: #{tpu_custom_call.1} parent=1 // pred_check
      _
    $region27: #{tpu_custom_call.1} parent=1 // pred_check_branch
      %55 = sbr.rel (0) target = $region29
    $region28: #{tpu_custom_call.1} parent=1 // pred_region
      _
    $region29: #{tpu_custom_call.1} parent=1 // pred_fallthru
      _
    // Predicated region
    $region30: #{tpu_custom_call.1} parent=1 // pred_check
      _
    $region31: #{tpu_custom_call.1} parent=1 // pred_check_branch
      %57 = sbr.rel (0) target = $region33
    $region32: #{tpu_custom_call.1} parent=1 // pred_region
      %59 = vsyncadd [#allocation6], 0
      %s60 = sshll.u32 %s7, 4
      %s61 = int_to_ptr.hbm [resolvable:$true] %s60
      %s62 = sshll.u32 [#allocation7], 4
      %s63 = int_to_ptr.vmem [resolvable:$true] %s62
      %68 = dma.hbm_to_vmem [thread:$0]  %s61, 1536, %s63, [#allocation6], 128, 128, 8
    $region33: #{tpu_custom_call.1} parent=1 // pred_fallthru
      _
    // Predicated region
    $region34: #{tpu_custom_call.1} parent=1 // pred_check
      _
    $region35: #{tpu_custom_call.1} parent=1 // pred_check_branch
      %70 = sbr.rel (0) target = $region37
    $region36: #{tpu_custom_call.1} parent=1 // pred_region
      %72 = vsyncadd [#allocation9], 0
      %s74 = sshll.u32 %s8, 4
      %s75 = int_to_ptr.hbm [resolvable:$true] %s74
      %s76 = sshll.u32 [#allocation8], 4
      %s77 = int_to_ptr.vmem [resolvable:$true] %s76
      %79 = dma.hbm_to_vmem [thread:$0]  %s75, 16, %s77, [#allocation9]
    $region37: #{tpu_custom_call.1} parent=1 // pred_fallthru
      _
    // Predicated region
    $region38: #{tpu_custom_call.1} parent=1 // pred_check
      _
    $region39: #{tpu_custom_call.1} parent=1 // pred_check_branch
      %81 = sbr.rel (0) target = $region41
    $region40: #{tpu_custom_call.1} parent=1 // pred_region
      %83 = vsyncadd [#allocation9], 0
      %s84 = sshll.u32 %s9, 4
      %s85 = int_to_ptr.hbm [resolvable:$true] %s84
      %s86 = sshll.u32 [#allocation10], 4
      %s87 = int_to_ptr.vmem [resolvable:$true] %s86
      %92 = dma.hbm_to_vmem [thread:$0]  %s85, 4096, %s87, [#allocation9], 512, 512, 32
    $region41: #{tpu_custom_call.1} parent=1 // pred_fallthru
      _
    // Predicated region
    $region42: #{tpu_custom_call.1} parent=1 // pred_check
      _
    $region43: #{tpu_custom_call.1} parent=1 // pred_check_branch
      %94 = sbr.rel (0) target = $region45
    $region44: #{tpu_custom_call.1} parent=1 // pred_region
      %96 = vsyncadd [#allocation12], 0
      %s97 = sshll.u32 %s10, 4
      %s98 = int_to_ptr.hbm [resolvable:$true] %s97
      %s99 = sshll.u32 [#allocation11], 4
      %s100 = int_to_ptr.vmem [resolvable:$true] %s99
      %105 = dma.hbm_to_vmem [thread:$0]  %s98, 8192, %s100, [#allocation12], 512, 512, 32
    $region45: #{tpu_custom_call.1} parent=1 // pred_fallthru
      _
    // Predicated region
    $region46: #{tpu_custom_call.1} parent=1 // pred_check
      _
    $region47: #{tpu_custom_call.1} parent=1 // pred_check_branch
      %107 = sbr.rel (0) target = $region49
    $region48: #{tpu_custom_call.1} parent=1 // pred_region
      _
    $region49: #{tpu_custom_call.1} parent=1 // pred_fallthru
      _
    // Predicated region
    $region50: #{tpu_custom_call.1} parent=1 // pred_check
      _
    $region51: #{tpu_custom_call.1} parent=1 // pred_check_branch
      %109 = sbr.rel (0) target = $region53
    $region52: #{tpu_custom_call.1} parent=1 // pred_region
      _
    $region53: #{tpu_custom_call.1} parent=1 // pred_fallthru
      _
    // Predicated region
    $region54: #{tpu_custom_call.1} parent=1 // pred_check
      _
    $region55: #{tpu_custom_call.1} parent=1 // pred_check_branch
      %111 = sbr.rel (0) target = $region57
    $region56: #{tpu_custom_call.1} parent=1 // pred_region
      _
    $region57: #{tpu_custom_call.1} parent=1 // pred_fallthru
      _
    // Predicated region
    $region58: #{tpu_custom_call.1} parent=1 // pred_check
      _
    $region59: #{tpu_custom_call.1} parent=1 // pred_check_branch
      %113 = sbr.rel (0) target = $region61
    $region60: #{tpu_custom_call.1} parent=1 // pred_region
      %115 = dma.done [#allocation3], 128
    $region61: #{tpu_custom_call.1} parent=1 // pred_fallthru
      _
    // Predicated region
    $region62: #{tpu_custom_call.1} parent=1 // pred_check
      _
    $region63: #{tpu_custom_call.1} parent=1 // pred_check_branch
      %117 = sbr.rel (0) target = $region65
    $region64: #{tpu_custom_call.1} parent=1 // pred_region
      %119 = dma.done [#allocation6], 128
    $region65: #{tpu_custom_call.1} parent=1 // pred_fallthru
      _
    // Predicated region
    $region66: #{tpu_custom_call.1} parent=1 // pred_check
      _
    $region67: #{tpu_custom_call.1} parent=1 // pred_check_branch
      %121 = sbr.rel (0) target = $region69
    $region68: #{tpu_custom_call.1} parent=1 // pred_region
      %123 = dma.done [#allocation6], 1536
    $region69: #{tpu_custom_call.1} parent=1 // pred_fallthru
      _
    // Predicated region
    $region70: #{tpu_custom_call.1} parent=1 // pred_check
      _
    $region71: #{tpu_custom_call.1} parent=1 // pred_check_branch
      %125 = sbr.rel (0) target = $region73
    $region72: #{tpu_custom_call.1} parent=1 // pred_region
      %127 = dma.done [#allocation9], 16
    $region73: #{tpu_custom_call.1} parent=1 // pred_fallthru
      _
    // Predicated region
    $region74: #{tpu_custom_call.1} parent=1 // pred_check
      _
    $region75: #{tpu_custom_call.1} parent=1 // pred_check_branch
      %129 = sbr.rel (0) target = $region77
    $region76: #{tpu_custom_call.1} parent=1 // pred_region
      %131 = dma.done [#allocation9], 4096
    $region77: #{tpu_custom_call.1} parent=1 // pred_fallthru
      _
    // Predicated region
    $region78: #{tpu_custom_call.1} parent=1 // pred_check
      _
    $region79: #{tpu_custom_call.1} parent=1 // pred_check_branch
      %133 = sbr.rel (0) target = $region81
    $region80: #{tpu_custom_call.1} parent=1 // pred_region
      %135 = dma.done [#allocation12], 8192
    $region81: #{tpu_custom_call.1} parent=1 // pred_fallthru
      _
    %v136 = vld [vmem:[%s0] sm:$0xff]
    %v137 = vld [vmem:[%s0 + $0x8] sm:$0xff]
    %v138 = vld [vmem:[%s0 + $0x10] sm:$0xff]
    %v139 = vld [vmem:[%s0 + $0x18] sm:$0xff]
    %v140 = vld [vmem:[%s5] sm:$0x7]
    %v141 = vld [vmem:[%s6] sm:$0x1]
    %v143 = vperm.slane %v141, 0
    %vm145 = vcmask 23552
    %v147 = vsel %vm145, %v136, 0
    %v150 = vsel %vm145, %v137, 0
    %v153 = vsel %vm145, %v138, 0
    %v156 = vsel %vm145, %v139, 0
    %vm158 = vcmask 1042432
    %v160 = vsel %vm158, %v140, 0
    %162 = vmatpush.msra.mxu0 0.0
    %163 = vmatpush.msra.mxu0 0.0
    %164 = vmatpush.msra.mxu0 0.0
    %165 = vmatpush.msra.mxu0 0.0
    %166 = vmatpush.msra.mxu0 0.0
    %167 = vmatpush.msra.mxu0 0.0
    %168 = vmatpush.msra.mxu0 0.0
    %169 = vmatpush.msra.mxu0 0.0
    %170 = vmatpush.msra.mxu0 0.0
    %171 = vmatpush.msra.mxu0 0.0
    %172 = vmatpush.msra.mxu0 0.0
    %173 = vmatpush.msra.mxu0 0.0
    %174 = vmatpush.msra.mxu0 0.0
    %175 = vmatpush.msra.mxu0 0.0
    %176 = vmatpush.msra.mxu0 0.0
    %177 = vmatpush.msra.mxu0 %v160
    %178 = vmatmul.f32.gmra.mxu0 %v147
    %v179 = vpop.f32.mrf.mxu0
    %v180 = vadd.f32 %v143, %v179
    %181 = vmatmul.f32.gmra.mxu0 %v150
    %v182 = vpop.f32.mrf.mxu0
    %v183 = vadd.f32 %v143, %v182
    %184 = vmatmul.f32.gmra.mxu0 %v153
    %v185 = vpop.f32.mrf.mxu0
    %v186 = vadd.f32 %v143, %v185
    %187 = vmatmul.f32.gmra.mxu0 %v156
    %v188 = vpop.f32.mrf.mxu0
    %v189 = vadd.f32 %v143, %v188
    %190 = vdwg.mxu0
    %v191 = vmax.f32 %v180, 0.0
    %v192 = vmax.f32 %v183, 0.0
    %v193 = vmax.f32 %v186, 0.0
    %v194 = vmax.f32 %v189, 0.0
    %v195 = vld [vmem:[%s1] sm:$0xff]
    %v196 = vld [vmem:[%s1 + $0x8] sm:$0xff]
    %v197 = vld [vmem:[%s1 + $0x10] sm:$0xff]
    %v198 = vld [vmem:[%s1 + $0x18] sm:$0xff]
    %v199 = vld [vmem:[%s1 + $0x20] sm:$0xff]
    %v200 = vld [vmem:[%s1 + $0x28] sm:$0xff]
    %vm201 = vcmask 261120
    %v203 = vsel %vm201, %v195, 0
    %v206 = vsel %vm201, %v196, 0
    %v209 = vsel %vm201, %v197, 0
    %v212 = vsel %vm201, %v198, 0
    %v215 = vsel %vm201, %v199, 0
    %v218 = vsel %vm201, %v200, 0
    %220 = vmatpush.msra.mxu0 0.0
    %221 = vmatpush.msra.mxu0 0.0
    %222 = vmatpush.msra.mxu0 0.0
    %223 = vmatpush.msra.mxu0 0.0
    %224 = vmatpush.msra.mxu0 0.0
    %225 = vmatpush.msra.mxu0 0.0
    %226 = vmatpush.msra.mxu0 0.0
    %227 = vmatpush.msra.mxu0 0.0
    %228 = vmatpush.msra.mxu0 0.0
    %229 = vmatpush.msra.mxu0 0.0
    %230 = vmatpush.msra.mxu0 0.0
    %231 = vmatpush.msra.mxu0 0.0
    %232 = vmatpush.msra.mxu0 %v194
    %233 = vmatpush.msra.mxu0 %v193
    %234 = vmatpush.msra.mxu0 %v192
    %235 = vmatpush.msra.mxu0 %v191
    %236 = vmatmul.f32.gmra.mxu0 %v203
    %v237 = vpop.f32.mrf.mxu0
    %v238 = vadd.f32 0.0, %v237
    %239 = vmatmul.f32.gmra.mxu0 %v206
    %v240 = vpop.f32.mrf.mxu0
    %v241 = vadd.f32 0.0, %v240
    %242 = vmatmul.f32.gmra.mxu0 %v209
    %v243 = vpop.f32.mrf.mxu0
    %v244 = vadd.f32 0.0, %v243
    %245 = vmatmul.f32.gmra.mxu0 %v212
    %v246 = vpop.f32.mrf.mxu0
    %v247 = vadd.f32 0.0, %v246
    %248 = vmatmul.f32.gmra.mxu0 %v215
    %v249 = vpop.f32.mrf.mxu0
    %v250 = vadd.f32 0.0, %v249
    %251 = vmatmul.f32.gmra.mxu0 %v218
    %v252 = vpop.f32.mrf.mxu0
    %v253 = vadd.f32 0.0, %v252
    %254 = vdwg.mxu0
    %v255 = vld [vmem:[%s2] sm:$0xff]
    %v256 = vld [vmem:[%s2 + $0x8] sm:$0xff]
    %v257 = vld [vmem:[%s2 + $0x10] sm:$0xff]
    %v258 = vld [vmem:[%s2 + $0x18] sm:$0xff]
    %v259 = vld [vmem:[%s2 + $0x20] sm:$0xff]
    %v260 = vld [vmem:[%s2 + $0x28] sm:$0xff]
    %v262 = vsel %vm201, %v255, 0
    %v265 = vsel %vm201, %v256, 0
    %v268 = vsel %vm201, %v257, 0
    %v271 = vsel %vm201, %v258, 0
    %v274 = vsel %vm201, %v259, 0
    %v277 = vsel %vm201, %v260, 0
    %279 = vmatpush.msra.mxu0 0.0
    %280 = vmatpush.msra.mxu0 0.0
    %281 = vmatpush.msra.mxu0 0.0
    %282 = vmatpush.msra.mxu0 0.0
    %283 = vmatpush.msra.mxu0 0.0
    %284 = vmatpush.msra.mxu0 0.0
    %285 = vmatpush.msra.mxu0 0.0
    %286 = vmatpush.msra.mxu0 0.0
    %287 = vmatpush.msra.mxu0 0.0
    %288 = vmatpush.msra.mxu0 0.0
    %289 = vmatpush.msra.mxu0 0.0
    %290 = vmatpush.msra.mxu0 0.0
    %291 = vmatpush.msra.mxu0 %v194
    %292 = vmatpush.msra.mxu0 %v193
    %293 = vmatpush.msra.mxu0 %v192
    %294 = vmatpush.msra.mxu0 %v191
    %295 = vmatmul.f32.gmra.mxu0 %v262
    %v296 = vpop.f32.mrf.mxu0
    %v297 = vadd.f32 0.0, %v296
    %298 = vmatmul.f32.gmra.mxu0 %v265
    %v299 = vpop.f32.mrf.mxu0
    %v300 = vadd.f32 0.0, %v299
    %301 = vmatmul.f32.gmra.mxu0 %v268
    %v302 = vpop.f32.mrf.mxu0
    %v303 = vadd.f32 0.0, %v302
    %304 = vmatmul.f32.gmra.mxu0 %v271
    %v305 = vpop.f32.mrf.mxu0
    %v306 = vadd.f32 0.0, %v305
    %307 = vmatmul.f32.gmra.mxu0 %v274
    %v308 = vpop.f32.mrf.mxu0
    %v309 = vadd.f32 0.0, %v308
    %310 = vmatmul.f32.gmra.mxu0 %v277
    %v311 = vpop.f32.mrf.mxu0
    %v312 = vadd.f32 0.0, %v311
    %313 = vdwg.mxu0
    %v314 = vmax.f32 %v238, %v297
    %v315 = vmax.f32 %v241, %v300
    %v316 = vmax.f32 %v244, %v303
    %v317 = vmax.f32 %v247, %v306
    %v318 = vmax.f32 %v250, %v309
    %v319 = vmax.f32 %v253, %v312
    %v320 = vld [vmem:[#allocation8] sm:$0x1]
    %v321 = vld [vmem:[#allocation7] sm:$0xff]
    %v322 = vld [vmem:[#allocation7 + $0x8] sm:$0xff]
    %v323 = vld [vmem:[#allocation7 + $0x10] sm:$0xff]
    %v324 = vld [vmem:[#allocation7 + $0x18] sm:$0xff]
    %v326 = vsel %vm201, %v314, 0
    %v329 = vsel %vm201, %v315, 0
    %331 = vmatpush.msra.mxu0 0.0
    %332 = vmatpush.msra.mxu0 0.0
    %333 = vmatpush.msra.mxu0 0.0
    %334 = vmatpush.msra.mxu0 0.0
    %335 = vmatpush.msra.mxu0 0.0
    %336 = vmatpush.msra.mxu0 0.0
    %337 = vmatpush.msra.mxu0 0.0
    %338 = vmatpush.msra.mxu0 0.0
    %339 = vmatpush.msra.mxu0 0.0
    %340 = vmatpush.msra.mxu0 0.0
    %341 = vmatpush.msra.mxu0 0.0
    %342 = vmatpush.msra.mxu0 0.0
    %343 = vmatpush.msra.mxu0 %v324
    %344 = vmatpush.msra.mxu0 %v323
    %345 = vmatpush.msra.mxu0 %v322
    %346 = vmatpush.msra.mxu0 %v321
    %347 = vmatmul.f32.gmra.mxu0 %v326
    %v348 = vpop.f32.mrf.mxu0
    %v349 = vadd.f32 0.0, %v348
    %350 = vmatmul.f32.gmra.mxu0 %v329
    %v351 = vpop.f32.mrf.mxu0
    %v352 = vadd.f32 0.0, %v351
    %353 = vdwg.mxu0
    %v355 = vperm.slane %v320, 0
    %v357 = vadd.f32 %v355, %v349
    %v358 = vadd.f32 %v355, %v352
    %s359 = scalar_lea.vmem [#allocation7], 32
    %v360 = vld [vmem:[%s359] sm:$0xff]
    %v361 = vld [vmem:[%s359 + $0x8] sm:$0xff]
    %v362 = vld [vmem:[%s359 + $0x10] sm:$0xff]
    %v363 = vld [vmem:[%s359 + $0x18] sm:$0xff]
    %v365 = vsel %vm201, %v316, 0
    %v368 = vsel %vm201, %v317, 0
    %370 = vmatpush.msra.mxu0 0.0
    %371 = vmatpush.msra.mxu0 0.0
    %372 = vmatpush.msra.mxu0 0.0
    %373 = vmatpush.msra.mxu0 0.0
    %374 = vmatpush.msra.mxu0 0.0
    %375 = vmatpush.msra.mxu0 0.0
    %376 = vmatpush.msra.mxu0 0.0
    %377 = vmatpush.msra.mxu0 0.0
    %378 = vmatpush.msra.mxu0 0.0
    %379 = vmatpush.msra.mxu0 0.0
    %380 = vmatpush.msra.mxu0 0.0
    %381 = vmatpush.msra.mxu0 0.0
    %382 = vmatpush.msra.mxu0 %v363
    %383 = vmatpush.msra.mxu0 %v362
    %384 = vmatpush.msra.mxu0 %v361
    %385 = vmatpush.msra.mxu0 %v360
    %386 = vmatmul.f32.gmra.mxu0 %v365
    %v387 = vpop.f32.mrf.mxu0
    %v388 = vadd.f32 0.0, %v387
    %389 = vmatmul.f32.gmra.mxu0 %v368
    %v390 = vpop.f32.mrf.mxu0
    %v391 = vadd.f32 0.0, %v390
    %392 = vdwg.mxu0
    %v393 = vadd.f32 %v357, %v388
    %v394 = vadd.f32 %v358, %v391
    %s395 = scalar_lea.vmem [#allocation7], 64
    %v396 = vld [vmem:[%s395] sm:$0xff]
    %v397 = vld [vmem:[%s395 + $0x8] sm:$0xff]
    %v398 = vld [vmem:[%s395 + $0x10] sm:$0xff]
    %v399 = vld [vmem:[%s395 + $0x18] sm:$0xff]
    %v401 = vsel %vm201, %v318, 0
    %v404 = vsel %vm201, %v319, 0
    %406 = vmatpush.msra.mxu0 0.0
    %407 = vmatpush.msra.mxu0 0.0
    %408 = vmatpush.msra.mxu0 0.0
    %409 = vmatpush.msra.mxu0 0.0
    %410 = vmatpush.msra.mxu0 0.0
    %411 = vmatpush.msra.mxu0 0.0
    %412 = vmatpush.msra.mxu0 0.0
    %413 = vmatpush.msra.mxu0 0.0
    %414 = vmatpush.msra.mxu0 0.0
    %415 = vmatpush.msra.mxu0 0.0
    %416 = vmatpush.msra.mxu0 0.0
    %417 = vmatpush.msra.mxu0 0.0
    %418 = vmatpush.msra.mxu0 %v399
    %419 = vmatpush.msra.mxu0 %v398
    %420 = vmatpush.msra.mxu0 %v397
    %421 = vmatpush.msra.mxu0 %v396
    %422 = vmatmul.f32.gmra.mxu0 %v401
    %v423 = vpop.f32.mrf.mxu0
    %v424 = vadd.f32 0.0, %v423
    %425 = vmatmul.f32.gmra.mxu0 %v404
    %v426 = vpop.f32.mrf.mxu0
    %v427 = vadd.f32 0.0, %v426
    %428 = vdwg.mxu0
    %v429 = vadd.f32 %v393, %v424
    %v430 = vadd.f32 %v394, %v427
    %v431 = vmax.f32 %v429, 0.0
    %v432 = vmax.f32 %v430, 0.0
    %v433 = vld [vmem:[#allocation2] sm:$0xff]
    %vm434 = vcmask 130048
    %v436 = vsel %vm434, %v433, 0
    %438 = vmatpush.msra.mxu0 0.0
    %439 = vmatpush.msra.mxu0 0.0
    %440 = vmatpush.msra.mxu0 0.0
    %441 = vmatpush.msra.mxu0 0.0
    %442 = vmatpush.msra.mxu0 0.0
    %443 = vmatpush.msra.mxu0 0.0
    %444 = vmatpush.msra.mxu0 0.0
    %445 = vmatpush.msra.mxu0 0.0
    %446 = vmatpush.msra.mxu0 0.0
    %447 = vmatpush.msra.mxu0 0.0
    %448 = vmatpush.msra.mxu0 0.0
    %449 = vmatpush.msra.mxu0 0.0
    %450 = vmatpush.msra.mxu0 0.0
    %451 = vmatpush.msra.mxu0 0.0
    %452 = vmatpush.msra.mxu0 %v432
    %453 = vmatpush.msra.mxu0 %v431
    %454 = vmatmul.f32.gmra.mxu0 %v436
    %v455 = vpop.f32.mrf.mxu0
    %v456 = vadd.f32 0.0, %v455
    %457 = vdwg.mxu0
    %v458 = vld [vmem:[#allocation5] sm:$0xff]
    %v460 = vsel %vm434, %v458, 0
    %462 = vmatpush.msra.mxu0 0.0
    %463 = vmatpush.msra.mxu0 0.0
    %464 = vmatpush.msra.mxu0 0.0
    %465 = vmatpush.msra.mxu0 0.0
    %466 = vmatpush.msra.mxu0 0.0
    %467 = vmatpush.msra.mxu0 0.0
    %468 = vmatpush.msra.mxu0 0.0
    %469 = vmatpush.msra.mxu0 0.0
    %470 = vmatpush.msra.mxu0 0.0
    %471 = vmatpush.msra.mxu0 0.0
    %472 = vmatpush.msra.mxu0 0.0
    %473 = vmatpush.msra.mxu0 0.0
    %474 = vmatpush.msra.mxu0 0.0
    %475 = vmatpush.msra.mxu0 0.0
    %476 = vmatpush.msra.mxu0 %v432
    %477 = vmatpush.msra.mxu0 %v431
    %478 = vmatmul.f32.gmra.mxu0 %v460
    %v479 = vpop.f32.mrf.mxu0
    %v480 = vadd.f32 0.0, %v479
    %481 = vdwg.mxu0
    %v482 = vmax.f32 %v456, %v480
    %v483 = vld [vmem:[#allocation10] sm:$0xff]
    %v484 = vld [vmem:[#allocation10 + $0x8] sm:$0xff]
    %v485 = vld [vmem:[#allocation10 + $0x10] sm:$0xff]
    %v486 = vld [vmem:[#allocation10 + $0x18] sm:$0xff]
    %v487 = vld [vmem:[#allocation10 + $0x20] sm:$0xff]
    %v488 = vld [vmem:[#allocation10 + $0x28] sm:$0xff]
    %v489 = vld [vmem:[#allocation10 + $0x30] sm:$0xff]
    %v490 = vld [vmem:[#allocation10 + $0x38] sm:$0xff]
    %v491 = vld [vmem:[#allocation10 + $0x40] sm:$0xff]
    %v492 = vld [vmem:[#allocation10 + $0x48] sm:$0xff]
    %v493 = vld [vmem:[#allocation10 + $0x50] sm:$0xff]
    %v494 = vld [vmem:[#allocation10 + $0x58] sm:$0xff]
    %v495 = vld [vmem:[#allocation10 + $0x60] sm:$0xff]
    %v496 = vld [vmem:[#allocation10 + $0x68] sm:$0xff]
    %v497 = vld [vmem:[#allocation10 + $0x70] sm:$0xff]
    %v498 = vld [vmem:[#allocation10 + $0x78] sm:$0xff]
    %v499 = vld [vmem:[#allocation10 + $0x80] sm:$0xff]
    %v500 = vld [vmem:[#allocation10 + $0x88] sm:$0xff]
    %v501 = vld [vmem:[#allocation10 + $0x90] sm:$0xff]
    %v502 = vld [vmem:[#allocation10 + $0x98] sm:$0xff]
    %v503 = vld [vmem:[#allocation10 + $0xa0] sm:$0xff]
    %v504 = vld [vmem:[#allocation10 + $0xa8] sm:$0xff]
    %v505 = vld [vmem:[#allocation10 + $0xb0] sm:$0xff]
    %v506 = vld [vmem:[#allocation10 + $0xb8] sm:$0xff]
    %v507 = vld [vmem:[#allocation10 + $0xc0] sm:$0xff]
    %v508 = vld [vmem:[#allocation10 + $0xc8] sm:$0xff]
    %v509 = vld [vmem:[#allocation10 + $0xd0] sm:$0xff]
    %v510 = vld [vmem:[#allocation10 + $0xd8] sm:$0xff]
    %v511 = vld [vmem:[#allocation10 + $0xe0] sm:$0xff]
    %v512 = vld [vmem:[#allocation10 + $0xe8] sm:$0xff]
    %v513 = vld [vmem:[#allocation10 + $0xf0] sm:$0xff]
    %v514 = vld [vmem:[#allocation10 + $0xf8] sm:$0xff]
    %v515 = vld [vmem:[%s11] sm:$0xf]
    %v517 = vperm.slane %v515, 0
    %v518 = vperm.slane %v515, 1
    %v519 = vperm.slane %v515, 2
    %v520 = vperm.slane %v515, 3
    %vm525 = vcmask 523264
    %v527 = vsel %vm525, %v482, 0
    %529 = vmatpush.msra.mxu0 0.0
    %530 = vmatpush.msra.mxu0 0.0
    %531 = vmatpush.msra.mxu0 0.0
    %532 = vmatpush.msra.mxu0 0.0
    %533 = vmatpush.msra.mxu0 0.0
    %534 = vmatpush.msra.mxu0 0.0
    %535 = vmatpush.msra.mxu0 0.0
    %536 = vmatpush.msra.mxu0 0.0
    %537 = vmatpush.msra.mxu0 %v511
    %538 = vmatpush.msra.mxu0 %v507
    %539 = vmatpush.msra.mxu0 %v503
    %540 = vmatpush.msra.mxu0 %v499
    %541 = vmatpush.msra.mxu0 %v495
    %542 = vmatpush.msra.mxu0 %v491
    %543 = vmatpush.msra.mxu0 %v487
    %544 = vmatpush.msra.mxu0 %v483
    %545 = vmatmul.f32.gmra.mxu0 %v527
    %v546 = vpop.f32.mrf.mxu0
    %v547 = vadd.f32 %v517, %v546
    %548 = vdwg.mxu0
    %549 = vmatpush.msra.mxu0 0.0
    %550 = vmatpush.msra.mxu0 0.0
    %551 = vmatpush.msra.mxu0 0.0
    %552 = vmatpush.msra.mxu0 0.0
    %553 = vmatpush.msra.mxu0 0.0
    %554 = vmatpush.msra.mxu0 0.0
    %555 = vmatpush.msra.mxu0 0.0
    %556 = vmatpush.msra.mxu0 0.0
    %557 = vmatpush.msra.mxu0 %v512
    %558 = vmatpush.msra.mxu0 %v508
    %559 = vmatpush.msra.mxu0 %v504
    %560 = vmatpush.msra.mxu0 %v500
    %561 = vmatpush.msra.mxu0 %v496
    %562 = vmatpush.msra.mxu0 %v492
    %563 = vmatpush.msra.mxu0 %v488
    %564 = vmatpush.msra.mxu0 %v484
    %565 = vmatmul.f32.gmra.mxu0 %v527
    %v566 = vpop.f32.mrf.mxu0
    %v567 = vadd.f32 %v518, %v566
    %568 = vdwg.mxu0
    %569 = vmatpush.msra.mxu0 0.0
    %570 = vmatpush.msra.mxu0 0.0
    %571 = vmatpush.msra.mxu0 0.0
    %572 = vmatpush.msra.mxu0 0.0
    %573 = vmatpush.msra.mxu0 0.0
    %574 = vmatpush.msra.mxu0 0.0
    %575 = vmatpush.msra.mxu0 0.0
    %576 = vmatpush.msra.mxu0 0.0
    %577 = vmatpush.msra.mxu0 %v513
    %578 = vmatpush.msra.mxu0 %v509
    %579 = vmatpush.msra.mxu0 %v505
    %580 = vmatpush.msra.mxu0 %v501
    %581 = vmatpush.msra.mxu0 %v497
    %582 = vmatpush.msra.mxu0 %v493
    %583 = vmatpush.msra.mxu0 %v489
    %584 = vmatpush.msra.mxu0 %v485
    %585 = vmatmul.f32.gmra.mxu0 %v527
    %v586 = vpop.f32.mrf.mxu0
    %v587 = vadd.f32 %v519, %v586
    %588 = vdwg.mxu0
    %589 = vmatpush.msra.mxu0 0.0
    %590 = vmatpush.msra.mxu0 0.0
    %591 = vmatpush.msra.mxu0 0.0
    %592 = vmatpush.msra.mxu0 0.0
    %593 = vmatpush.msra.mxu0 0.0
    %594 = vmatpush.msra.mxu0 0.0
    %595 = vmatpush.msra.mxu0 0.0
    %596 = vmatpush.msra.mxu0 0.0
    %597 = vmatpush.msra.mxu0 %v514
    %598 = vmatpush.msra.mxu0 %v510
    %599 = vmatpush.msra.mxu0 %v506
    %600 = vmatpush.msra.mxu0 %v502
    %601 = vmatpush.msra.mxu0 %v498
    %602 = vmatpush.msra.mxu0 %v494
    %603 = vmatpush.msra.mxu0 %v490
    %604 = vmatpush.msra.mxu0 %v486
    %605 = vmatmul.f32.gmra.mxu0 %v527
    %v606 = vpop.f32.mrf.mxu0
    %v607 = vadd.f32 %v520, %v606
    %608 = vdwg.mxu0
    %v609 = vld [vmem:[#allocation11] sm:$0xff]
    %v610 = vld [vmem:[#allocation11 + $0x8] sm:$0xff]
    %v611 = vld [vmem:[#allocation11 + $0x10] sm:$0xff]
    %v612 = vld [vmem:[#allocation11 + $0x18] sm:$0xff]
    %v613 = vld [vmem:[#allocation11 + $0x20] sm:$0xff]
    %v614 = vld [vmem:[#allocation11 + $0x28] sm:$0xff]
    %v615 = vld [vmem:[#allocation11 + $0x30] sm:$0xff]
    %v616 = vld [vmem:[#allocation11 + $0x38] sm:$0xff]
    %v617 = vld [vmem:[#allocation11 + $0x40] sm:$0xff]
    %v618 = vld [vmem:[#allocation11 + $0x48] sm:$0xff]
    %v619 = vld [vmem:[#allocation11 + $0x50] sm:$0xff]
    %v620 = vld [vmem:[#allocation11 + $0x58] sm:$0xff]
    %v621 = vld [vmem:[#allocation11 + $0x60] sm:$0xff]
    %v622 = vld [vmem:[#allocation11 + $0x68] sm:$0xff]
    %v623 = vld [vmem:[#allocation11 + $0x70] sm:$0xff]
    %v624 = vld [vmem:[#allocation11 + $0x78] sm:$0xff]
    %v625 = vld [vmem:[#allocation11 + $0x80] sm:$0xff]
    %v626 = vld [vmem:[#allocation11 + $0x88] sm:$0xff]
    %v627 = vld [vmem:[#allocation11 + $0x90] sm:$0xff]
    %v628 = vld [vmem:[#allocation11 + $0x98] sm:$0xff]
    %v629 = vld [vmem:[#allocation11 + $0xa0] sm:$0xff]
    %v630 = vld [vmem:[#allocation11 + $0xa8] sm:$0xff]
    %v631 = vld [vmem:[#allocation11 + $0xb0] sm:$0xff]
    %v632 = vld [vmem:[#allocation11 + $0xb8] sm:$0xff]
    %v633 = vld [vmem:[#allocation11 + $0xc0] sm:$0xff]
    %v634 = vld [vmem:[#allocation11 + $0xc8] sm:$0xff]
    %v635 = vld [vmem:[#allocation11 + $0xd0] sm:$0xff]
    %v636 = vld [vmem:[#allocation11 + $0xd8] sm:$0xff]
    %v637 = vld [vmem:[#allocation11 + $0xe0] sm:$0xff]
    %v638 = vld [vmem:[#allocation11 + $0xe8] sm:$0xff]
    %v639 = vld [vmem:[#allocation11 + $0xf0] sm:$0xff]
    %v640 = vld [vmem:[#allocation11 + $0xf8] sm:$0xff]
    %v641 = vld [vmem:[#allocation11 + $0x100] sm:$0xff]
    %v642 = vld [vmem:[#allocation11 + $0x108] sm:$0xff]
    %v643 = vld [vmem:[#allocation11 + $0x110] sm:$0xff]
    %v644 = vld [vmem:[#allocation11 + $0x118] sm:$0xff]
    %v645 = vld [vmem:[#allocation11 + $0x120] sm:$0xff]
    %v646 = vld [vmem:[#allocation11 + $0x128] sm:$0xff]
    %v647 = vld [vmem:[#allocation11 + $0x130] sm:$0xff]
    %v648 = vld [vmem:[#allocation11 + $0x138] sm:$0xff]
    %v649 = vld [vmem:[#allocation11 + $0x140] sm:$0xff]
    %v650 = vld [vmem:[#allocation11 + $0x148] sm:$0xff]
    %v651 = vld [vmem:[#allocation11 + $0x150] sm:$0xff]
    %v652 = vld [vmem:[#allocation11 + $0x158] sm:$0xff]
    %v653 = vld [vmem:[#allocation11 + $0x160] sm:$0xff]
    %v654 = vld [vmem:[#allocation11 + $0x168] sm:$0xff]
    %v655 = vld [vmem:[#allocation11 + $0x170] sm:$0xff]
    %v656 = vld [vmem:[#allocation11 + $0x178] sm:$0xff]
    %v657 = vld [vmem:[#allocation11 + $0x180] sm:$0xff]
    %v658 = vld [vmem:[#allocation11 + $0x188] sm:$0xff]
    %v659 = vld [vmem:[#allocation11 + $0x190] sm:$0xff]
    %v660 = vld [vmem:[#allocation11 + $0x198] sm:$0xff]
    %v661 = vld [vmem:[#allocation11 + $0x1a0] sm:$0xff]
    %v662 = vld [vmem:[#allocation11 + $0x1a8] sm:$0xff]
    %v663 = vld [vmem:[#allocation11 + $0x1b0] sm:$0xff]
    %v664 = vld [vmem:[#allocation11 + $0x1b8] sm:$0xff]
    %v665 = vld [vmem:[#allocation11 + $0x1c0] sm:$0xff]
    %v666 = vld [vmem:[#allocation11 + $0x1c8] sm:$0xff]
    %v667 = vld [vmem:[#allocation11 + $0x1d0] sm:$0xff]
    %v668 = vld [vmem:[#allocation11 + $0x1d8] sm:$0xff]
    %v669 = vld [vmem:[#allocation11 + $0x1e0] sm:$0xff]
    %v670 = vld [vmem:[#allocation11 + $0x1e8] sm:$0xff]
    %v671 = vld [vmem:[#allocation11 + $0x1f0] sm:$0xff]
    %v672 = vld [vmem:[#allocation11 + $0x1f8] sm:$0xff]
    %673 = vmatpush.msra.mxu0 %v669
    %674 = vmatpush.msra.mxu0 %v665
    %675 = vmatpush.msra.mxu0 %v661
    %676 = vmatpush.msra.mxu0 %v657
    %677 = vmatpush.msra.mxu0 %v653
    %678 = vmatpush.msra.mxu0 %v649
    %679 = vmatpush.msra.mxu0 %v645
    %680 = vmatpush.msra.mxu0 %v641
    %681 = vmatpush.msra.mxu0 %v637
    %682 = vmatpush.msra.mxu0 %v633
    %683 = vmatpush.msra.mxu0 %v629
    %684 = vmatpush.msra.mxu0 %v625
    %685 = vmatpush.msra.mxu0 %v621
    %686 = vmatpush.msra.mxu0 %v617
    %687 = vmatpush.msra.mxu0 %v613
    %688 = vmatpush.msra.mxu0 %v609
    %689 = vmatmul.f32.gmra.mxu0 0.0
    %v690 = vpop.f32.mrf.mxu0
    %v691 = vadd.f32 0.0, %v690
    %692 = vdwg.mxu0
    %693 = vmatpush.msra.mxu0 %v670
    %694 = vmatpush.msra.mxu0 %v666
    %695 = vmatpush.msra.mxu0 %v662
    %696 = vmatpush.msra.mxu0 %v658
    %697 = vmatpush.msra.mxu0 %v654
    %698 = vmatpush.msra.mxu0 %v650
    %699 = vmatpush.msra.mxu0 %v646
    %700 = vmatpush.msra.mxu0 %v642
    %701 = vmatpush.msra.mxu0 %v638
    %702 = vmatpush.msra.mxu0 %v634
    %703 = vmatpush.msra.mxu0 %v630
    %704 = vmatpush.msra.mxu0 %v626
    %705 = vmatpush.msra.mxu0 %v622
    %706 = vmatpush.msra.mxu0 %v618
    %707 = vmatpush.msra.mxu0 %v614
    %708 = vmatpush.msra.mxu0 %v610
    %709 = vmatmul.f32.gmra.mxu0 0.0
    %v710 = vpop.f32.mrf.mxu0
    %v711 = vadd.f32 0.0, %v710
    %712 = vdwg.mxu0
    %713 = vmatpush.msra.mxu0 %v671
    %714 = vmatpush.msra.mxu0 %v667
    %715 = vmatpush.msra.mxu0 %v663
    %716 = vmatpush.msra.mxu0 %v659
    %717 = vmatpush.msra.mxu0 %v655
    %718 = vmatpush.msra.mxu0 %v651
    %719 = vmatpush.msra.mxu0 %v647
    %720 = vmatpush.msra.mxu0 %v643
    %721 = vmatpush.msra.mxu0 %v639
    %722 = vmatpush.msra.mxu0 %v635
    %723 = vmatpush.msra.mxu0 %v631
    %724 = vmatpush.msra.mxu0 %v627
    %725 = vmatpush.msra.mxu0 %v623
    %726 = vmatpush.msra.mxu0 %v619
    %727 = vmatpush.msra.mxu0 %v615
    %728 = vmatpush.msra.mxu0 %v611
    %729 = vmatmul.f32.gmra.mxu0 0.0
    %v730 = vpop.f32.mrf.mxu0
    %v731 = vadd.f32 0.0, %v730
    %732 = vdwg.mxu0
    %733 = vmatpush.msra.mxu0 %v672
    %734 = vmatpush.msra.mxu0 %v668
    %735 = vmatpush.msra.mxu0 %v664
    %736 = vmatpush.msra.mxu0 %v660
    %737 = vmatpush.msra.mxu0 %v656
    %738 = vmatpush.msra.mxu0 %v652
    %739 = vmatpush.msra.mxu0 %v648
    %740 = vmatpush.msra.mxu0 %v644
    %741 = vmatpush.msra.mxu0 %v640
    %742 = vmatpush.msra.mxu0 %v636
    %743 = vmatpush.msra.mxu0 %v632
    %744 = vmatpush.msra.mxu0 %v628
    %745 = vmatpush.msra.mxu0 %v624
    %746 = vmatpush.msra.mxu0 %v620
    %747 = vmatpush.msra.mxu0 %v616
    %748 = vmatpush.msra.mxu0 %v612
    %749 = vmatmul.f32.gmra.mxu0 0.0
    %v750 = vpop.f32.mrf.mxu0
    %v751 = vadd.f32 0.0, %v750
    %752 = vdwg.mxu0
    %v753 = vadd.f32 %v547, %v691
    %v754 = vadd.f32 %v567, %v711
    %v755 = vadd.f32 %v587, %v731
    %v756 = vadd.f32 %v607, %v751
    %v757 = vmul.f32 %v753, 0.5
    %v758 = vtanh.pop %v757
    %v759 = vadd.f32 %v758, 1.0
    %v760 = vmul.f32 %v759, 0.5
    %v761 = vmul.f32 %v754, 0.5
    %v762 = vtanh.pop %v761
    %v763 = vadd.f32 %v762, 1.0
    %v764 = vmul.f32 %v763, 0.5
    %v765 = vtanh.pop %v755
    %v766 = vmul.f32 %v756, 0.5
    %v767 = vtanh.pop %v766
    %v768 = vadd.f32 %v767, 1.0
    %v769 = vmul.f32 %v768, 0.5
    %v770 = vmul.f32 %v764, 0.0
    %v771 = vmul.f32 %v760, %v765
    %v772 = vadd.f32 %v770, %v771
    %v773 = vtanh.pop %v772
    %v774 = vmul.f32 %v769, %v773
    %775 = vmatpush.msra.mxu0 %v669
    %776 = vmatpush.msra.mxu0 %v665
    %777 = vmatpush.msra.mxu0 %v661
    %778 = vmatpush.msra.mxu0 %v657
    %779 = vmatpush.msra.mxu0 %v653
    %780 = vmatpush.msra.mxu0 %v649
    %781 = vmatpush.msra.mxu0 %v645
    %782 = vmatpush.msra.mxu0 %v641
    %783 = vmatpush.msra.mxu0 %v637
    %784 = vmatpush.msra.mxu0 %v633
    %785 = vmatpush.msra.mxu0 %v629
    %786 = vmatpush.msra.mxu0 %v625
    %787 = vmatpush.msra.mxu0 %v621
    %788 = vmatpush.msra.mxu0 %v617
    %789 = vmatpush.msra.mxu0 %v613
    %790 = vmatpush.msra.mxu0 %v609
    %791 = vmatmul.f32.gmra.mxu0 %v774
    %v792 = vpop.f32.mrf.mxu0
    %v793 = vadd.f32 0.0, %v792
    %794 = vdwg.mxu0
    %795 = vmatpush.msra.mxu0 %v670
    %796 = vmatpush.msra.mxu0 %v666
    %797 = vmatpush.msra.mxu0 %v662
    %798 = vmatpush.msra.mxu0 %v658
    %799 = vmatpush.msra.mxu0 %v654
    %800 = vmatpush.msra.mxu0 %v650
    %801 = vmatpush.msra.mxu0 %v646
    %802 = vmatpush.msra.mxu0 %v642
    %803 = vmatpush.msra.mxu0 %v638
    %804 = vmatpush.msra.mxu0 %v634
    %805 = vmatpush.msra.mxu0 %v630
    %806 = vmatpush.msra.mxu0 %v626
    %807 = vmatpush.msra.mxu0 %v622
    %808 = vmatpush.msra.mxu0 %v618
    %809 = vmatpush.msra.mxu0 %v614
    %810 = vmatpush.msra.mxu0 %v610
    %811 = vmatmul.f32.gmra.mxu0 %v774
    %v812 = vpop.f32.mrf.mxu0
    %v813 = vadd.f32 0.0, %v812
    %814 = vdwg.mxu0
    %815 = vmatpush.msra.mxu0 %v671
    %816 = vmatpush.msra.mxu0 %v667
    %817 = vmatpush.msra.mxu0 %v663
    %818 = vmatpush.msra.mxu0 %v659
    %819 = vmatpush.msra.mxu0 %v655
    %820 = vmatpush.msra.mxu0 %v651
    %821 = vmatpush.msra.mxu0 %v647
    %822 = vmatpush.msra.mxu0 %v643
    %823 = vmatpush.msra.mxu0 %v639
    %824 = vmatpush.msra.mxu0 %v635
    %825 = vmatpush.msra.mxu0 %v631
    %826 = vmatpush.msra.mxu0 %v627
    %827 = vmatpush.msra.mxu0 %v623
    %828 = vmatpush.msra.mxu0 %v619
    %829 = vmatpush.msra.mxu0 %v615
    %830 = vmatpush.msra.mxu0 %v611
    %831 = vmatmul.f32.gmra.mxu0 %v774
    %v832 = vpop.f32.mrf.mxu0
    %v833 = vadd.f32 0.0, %v832
    %834 = vdwg.mxu0
    %835 = vmatpush.msra.mxu0 %v672
    %836 = vmatpush.msra.mxu0 %v668
    %837 = vmatpush.msra.mxu0 %v664
    %838 = vmatpush.msra.mxu0 %v660
    %839 = vmatpush.msra.mxu0 %v656
    %840 = vmatpush.msra.mxu0 %v652
    %841 = vmatpush.msra.mxu0 %v648
    %842 = vmatpush.msra.mxu0 %v644
    %843 = vmatpush.msra.mxu0 %v640
    %844 = vmatpush.msra.mxu0 %v636
    %845 = vmatpush.msra.mxu0 %v632
    %846 = vmatpush.msra.mxu0 %v628
    %847 = vmatpush.msra.mxu0 %v624
    %848 = vmatpush.msra.mxu0 %v620
    %849 = vmatpush.msra.mxu0 %v616
    %850 = vmatpush.msra.mxu0 %v612
    %851 = vmatmul.f32.gmra.mxu0 %v774
    %v852 = vpop.f32.mrf.mxu0
    %v853 = vadd.f32 0.0, %v852
    %854 = vdwg.mxu0
    %v859 = vrot.slane %v793, 6
    %v860 = vrot.slane %v813, 6
    %v861 = vrot.slane %v833, 6
    %v862 = vrot.slane %v853, 6
    %v867 = vadd.f32 %v547, %v859
    %v868 = vadd.f32 %v567, %v860
    %v869 = vadd.f32 %v587, %v861
    %v870 = vadd.f32 %v607, %v862
    %v871 = vmul.f32 %v867, 0.5
    %v872 = vtanh.pop %v871
    %v873 = vadd.f32 %v872, 1.0
    %v874 = vmul.f32 %v873, 0.5
    %v875 = vmul.f32 %v868, 0.5
    %v876 = vtanh.pop %v875
    %v877 = vadd.f32 %v876, 1.0
    %v878 = vmul.f32 %v877, 0.5
    %v879 = vtanh.pop %v869
    %v880 = vmul.f32 %v870, 0.5
    %v881 = vtanh.pop %v880
    %v882 = vadd.f32 %v881, 1.0
    %v883 = vmul.f32 %v882, 0.5
    %v885 = vrot.slane %v772, 6
    %v887 = vmul.f32 %v878, %v885
    %v888 = vmul.f32 %v874, %v879
    %v889 = vadd.f32 %v887, %v888
    %v890 = vtanh.pop %v889
    %v891 = vmul.f32 %v883, %v890
    %v893 = vrot.slane %v891, 2
    %895 = vmatpush.msra.mxu0 %v669
    %896 = vmatpush.msra.mxu0 %v665
    %897 = vmatpush.msra.mxu0 %v661
    %898 = vmatpush.msra.mxu0 %v657
    %899 = vmatpush.msra.mxu0 %v653
    %900 = vmatpush.msra.mxu0 %v649
    %901 = vmatpush.msra.mxu0 %v645
    %902 = vmatpush.msra.mxu0 %v641
    %903 = vmatpush.msra.mxu0 %v637
    %904 = vmatpush.msra.mxu0 %v633
    %905 = vmatpush.msra.mxu0 %v629
    %906 = vmatpush.msra.mxu0 %v625
    %907 = vmatpush.msra.mxu0 %v621
    %908 = vmatpush.msra.mxu0 %v617
    %909 = vmatpush.msra.mxu0 %v613
    %910 = vmatpush.msra.mxu0 %v609
    %911 = vmatmul.f32.gmra.mxu0 %v893
    %v912 = vpop.f32.mrf.mxu0
    %v913 = vadd.f32 0.0, %v912
    %914 = vdwg.mxu0
    %915 = vmatpush.msra.mxu0 %v670
    %916 = vmatpush.msra.mxu0 %v666
    %917 = vmatpush.msra.mxu0 %v662
    %918 = vmatpush.msra.mxu0 %v658
    %919 = vmatpush.msra.mxu0 %v654
    %920 = vmatpush.msra.mxu0 %v650
    %921 = vmatpush.msra.mxu0 %v646
    %922 = vmatpush.msra.mxu0 %v642
    %923 = vmatpush.msra.mxu0 %v638
    %924 = vmatpush.msra.mxu0 %v634
    %925 = vmatpush.msra.mxu0 %v630
    %926 = vmatpush.msra.mxu0 %v626
    %927 = vmatpush.msra.mxu0 %v622
    %928 = vmatpush.msra.mxu0 %v618
    %929 = vmatpush.msra.mxu0 %v614
    %930 = vmatpush.msra.mxu0 %v610
    %931 = vmatmul.f32.gmra.mxu0 %v893
    %v932 = vpop.f32.mrf.mxu0
    %v933 = vadd.f32 0.0, %v932
    %934 = vdwg.mxu0
    %935 = vmatpush.msra.mxu0 %v671
    %936 = vmatpush.msra.mxu0 %v667
    %937 = vmatpush.msra.mxu0 %v663
    %938 = vmatpush.msra.mxu0 %v659
    %939 = vmatpush.msra.mxu0 %v655
    %940 = vmatpush.msra.mxu0 %v651
    %941 = vmatpush.msra.mxu0 %v647
    %942 = vmatpush.msra.mxu0 %v643
    %943 = vmatpush.msra.mxu0 %v639
    %944 = vmatpush.msra.mxu0 %v635
    %945 = vmatpush.msra.mxu0 %v631
    %946 = vmatpush.msra.mxu0 %v627
    %947 = vmatpush.msra.mxu0 %v623
    %948 = vmatpush.msra.mxu0 %v619
    %949 = vmatpush.msra.mxu0 %v615
    %950 = vmatpush.msra.mxu0 %v611
    %951 = vmatmul.f32.gmra.mxu0 %v893
    %v952 = vpop.f32.mrf.mxu0
    %v953 = vadd.f32 0.0, %v952
    %954 = vdwg.mxu0
    %955 = vmatpush.msra.mxu0 %v672
    %956 = vmatpush.msra.mxu0 %v668
    %957 = vmatpush.msra.mxu0 %v664
    %958 = vmatpush.msra.mxu0 %v660
    %959 = vmatpush.msra.mxu0 %v656
    %960 = vmatpush.msra.mxu0 %v652
    %961 = vmatpush.msra.mxu0 %v648
    %962 = vmatpush.msra.mxu0 %v644
    %963 = vmatpush.msra.mxu0 %v640
    %964 = vmatpush.msra.mxu0 %v636
    %965 = vmatpush.msra.mxu0 %v632
    %966 = vmatpush.msra.mxu0 %v628
    %967 = vmatpush.msra.mxu0 %v624
    %968 = vmatpush.msra.mxu0 %v620
    %969 = vmatpush.msra.mxu0 %v616
    %970 = vmatpush.msra.mxu0 %v612
    %971 = vmatmul.f32.gmra.mxu0 %v893
    %v972 = vpop.f32.mrf.mxu0
    %v973 = vadd.f32 0.0, %v972
    %974 = vdwg.mxu0
    %v979 = vrot.slane %v913, 4
    %v980 = vrot.slane %v933, 4
    %v981 = vrot.slane %v953, 4
    %v982 = vrot.slane %v973, 4
    %v987 = vadd.f32 %v547, %v979
    %v988 = vadd.f32 %v567, %v980
    %v989 = vadd.f32 %v587, %v981
    %v990 = vadd.f32 %v607, %v982
    %v991 = vmul.f32 %v987, 0.5
    %v992 = vtanh.pop %v991
    %v993 = vadd.f32 %v992, 1.0
    %v994 = vmul.f32 %v993, 0.5
    %v995 = vmul.f32 %v988, 0.5
    %v996 = vtanh.pop %v995
    %v997 = vadd.f32 %v996, 1.0
    %v998 = vmul.f32 %v997, 0.5
    %v999 = vtanh.pop %v989
    %v1000 = vmul.f32 %v990, 0.5
    %v1001 = vtanh.pop %v1000
    %v1002 = vadd.f32 %v1001, 1.0
    %v1003 = vmul.f32 %v1002, 0.5
    %v1005 = vrot.slane %v889, 6
    %v1007 = vmul.f32 %v998, %v1005
    %v1008 = vmul.f32 %v994, %v999
    %v1009 = vadd.f32 %v1007, %v1008
    %v1010 = vtanh.pop %v1009
    %v1011 = vmul.f32 %v1003, %v1010
    %v1013 = vrot.slane %v1011, 4
    %1015 = vmatpush.msra.mxu0 %v669
    %1016 = vmatpush.msra.mxu0 %v665
    %1017 = vmatpush.msra.mxu0 %v661
    %1018 = vmatpush.msra.mxu0 %v657
    %1019 = vmatpush.msra.mxu0 %v653
    %1020 = vmatpush.msra.mxu0 %v649
    %1021 = vmatpush.msra.mxu0 %v645
    %1022 = vmatpush.msra.mxu0 %v641
    %1023 = vmatpush.msra.mxu0 %v637
    %1024 = vmatpush.msra.mxu0 %v633
    %1025 = vmatpush.msra.mxu0 %v629
    %1026 = vmatpush.msra.mxu0 %v625
    %1027 = vmatpush.msra.mxu0 %v621
    %1028 = vmatpush.msra.mxu0 %v617
    %1029 = vmatpush.msra.mxu0 %v613
    %1030 = vmatpush.msra.mxu0 %v609
    %1031 = vmatmul.f32.gmra.mxu0 %v1013
    %v1032 = vpop.f32.mrf.mxu0
    %v1033 = vadd.f32 0.0, %v1032
    %1034 = vdwg.mxu0
    %1035 = vmatpush.msra.mxu0 %v670
    %1036 = vmatpush.msra.mxu0 %v666
    %1037 = vmatpush.msra.mxu0 %v662
    %1038 = vmatpush.msra.mxu0 %v658
    %1039 = vmatpush.msra.mxu0 %v654
    %1040 = vmatpush.msra.mxu0 %v650
    %1041 = vmatpush.msra.mxu0 %v646
    %1042 = vmatpush.msra.mxu0 %v642
    %1043 = vmatpush.msra.mxu0 %v638
    %1044 = vmatpush.msra.mxu0 %v634
    %1045 = vmatpush.msra.mxu0 %v630
    %1046 = vmatpush.msra.mxu0 %v626
    %1047 = vmatpush.msra.mxu0 %v622
    %1048 = vmatpush.msra.mxu0 %v618
    %1049 = vmatpush.msra.mxu0 %v614
    %1050 = vmatpush.msra.mxu0 %v610
    %1051 = vmatmul.f32.gmra.mxu0 %v1013
    %v1052 = vpop.f32.mrf.mxu0
    %v1053 = vadd.f32 0.0, %v1052
    %1054 = vdwg.mxu0
    %1055 = vmatpush.msra.mxu0 %v671
    %1056 = vmatpush.msra.mxu0 %v667
    %1057 = vmatpush.msra.mxu0 %v663
    %1058 = vmatpush.msra.mxu0 %v659
    %1059 = vmatpush.msra.mxu0 %v655
    %1060 = vmatpush.msra.mxu0 %v651
    %1061 = vmatpush.msra.mxu0 %v647
    %1062 = vmatpush.msra.mxu0 %v643
    %1063 = vmatpush.msra.mxu0 %v639
    %1064 = vmatpush.msra.mxu0 %v635
    %1065 = vmatpush.msra.mxu0 %v631
    %1066 = vmatpush.msra.mxu0 %v627
    %1067 = vmatpush.msra.mxu0 %v623
    %1068 = vmatpush.msra.mxu0 %v619
    %1069 = vmatpush.msra.mxu0 %v615
    %1070 = vmatpush.msra.mxu0 %v611
    %1071 = vmatmul.f32.gmra.mxu0 %v1013
    %v1072 = vpop.f32.mrf.mxu0
    %v1073 = vadd.f32 0.0, %v1072
    %1074 = vdwg.mxu0
    %1075 = vmatpush.msra.mxu0 %v672
    %1076 = vmatpush.msra.mxu0 %v668
    %1077 = vmatpush.msra.mxu0 %v664
    %1078 = vmatpush.msra.mxu0 %v660
    %1079 = vmatpush.msra.mxu0 %v656
    %1080 = vmatpush.msra.mxu0 %v652
    %1081 = vmatpush.msra.mxu0 %v648
    %1082 = vmatpush.msra.mxu0 %v644
    %1083 = vmatpush.msra.mxu0 %v640
    %1084 = vmatpush.msra.mxu0 %v636
    %1085 = vmatpush.msra.mxu0 %v632
    %1086 = vmatpush.msra.mxu0 %v628
    %1087 = vmatpush.msra.mxu0 %v624
    %1088 = vmatpush.msra.mxu0 %v620
    %1089 = vmatpush.msra.mxu0 %v616
    %1090 = vmatpush.msra.mxu0 %v612
    %1091 = vmatmul.f32.gmra.mxu0 %v1013
    %v1092 = vpop.f32.mrf.mxu0
    %v1093 = vadd.f32 0.0, %v1092
    %1094 = vdwg.mxu0
    %v1099 = vrot.slane %v1033, 2
    %v1100 = vrot.slane %v1053, 2
    %v1101 = vrot.slane %v1073, 2
    %v1102 = vrot.slane %v1093, 2
    %v1107 = vadd.f32 %v547, %v1099
    %v1108 = vadd.f32 %v567, %v1100
    %v1109 = vadd.f32 %v587, %v1101
    %v1110 = vadd.f32 %v607, %v1102
    %v1111 = vmul.f32 %v1107, 0.5
    %v1112 = vtanh.pop %v1111
    %v1113 = vadd.f32 %v1112, 1.0
    %v1114 = vmul.f32 %v1113, 0.5
    %v1115 = vmul.f32 %v1108, 0.5
    %v1116 = vtanh.pop %v1115
    %v1117 = vadd.f32 %v1116, 1.0
    %v1118 = vmul.f32 %v1117, 0.5
    %v1119 = vtanh.pop %v1109
    %v1120 = vmul.f32 %v1110, 0.5
    %v1121 = vtanh.pop %v1120
    %v1122 = vadd.f32 %v1121, 1.0
    %v1123 = vmul.f32 %v1122, 0.5
    %v1125 = vrot.slane %v1009, 6
    %v1127 = vmul.f32 %v1118, %v1125
    %v1128 = vmul.f32 %v1114, %v1119
    %v1129 = vadd.f32 %v1127, %v1128
    %v1130 = vtanh.pop %v1129
    %v1131 = vmul.f32 %v1123, %v1130
    %v1132 = vld [vmem:[%s12] sm:$0xff]
    %v1133 = vld [vmem:[%s12 + $0x8] sm:$0xff]
    %v1134 = vld [vmem:[%s12 + $0x10] sm:$0xff]
    %v1135 = vld [vmem:[%s12 + $0x18] sm:$0xff]
    %v1136 = vld [vmem:[%s12 + $0x20] sm:$0xff]
    %v1137 = vld [vmem:[%s12 + $0x28] sm:$0xff]
    %v1138 = vld [vmem:[%s12 + $0x30] sm:$0xff]
    %v1139 = vld [vmem:[%s12 + $0x38] sm:$0xff]
    %v1140 = vld [vmem:[%s12 + $0x40] sm:$0xff]
    %v1141 = vld [vmem:[%s12 + $0x48] sm:$0xff]
    %v1142 = vld [vmem:[%s12 + $0x50] sm:$0xff]
    %v1143 = vld [vmem:[%s12 + $0x58] sm:$0xff]
    %v1144 = vld [vmem:[%s12 + $0x60] sm:$0xff]
    %v1145 = vld [vmem:[%s12 + $0x68] sm:$0xff]
    %v1146 = vld [vmem:[%s12 + $0x70] sm:$0xff]
    %v1147 = vld [vmem:[%s12 + $0x78] sm:$0xff]
    %v1148 = vld [vmem:[%s13] sm:$0x1]
    %v1150 = vperm.slane %v1148, 0
    %v1153 = vrot.slane %v1131, 6
    %1155 = vmatpush.msra.mxu0 %v1147
    %1156 = vmatpush.msra.mxu0 %v1146
    %1157 = vmatpush.msra.mxu0 %v1145
    %1158 = vmatpush.msra.mxu0 %v1144
    %1159 = vmatpush.msra.mxu0 %v1143
    %1160 = vmatpush.msra.mxu0 %v1142
    %1161 = vmatpush.msra.mxu0 %v1141
    %1162 = vmatpush.msra.mxu0 %v1140
    %1163 = vmatpush.msra.mxu0 %v1139
    %1164 = vmatpush.msra.mxu0 %v1138
    %1165 = vmatpush.msra.mxu0 %v1137
    %1166 = vmatpush.msra.mxu0 %v1136
    %1167 = vmatpush.msra.mxu0 %v1135
    %1168 = vmatpush.msra.mxu0 %v1134
    %1169 = vmatpush.msra.mxu0 %v1133
    %1170 = vmatpush.msra.mxu0 %v1132
    %1171 = vmatmul.f32.gmra.mxu0 %v1153
    %v1172 = vpop.f32.mrf.mxu0
    %v1173 = vadd.f32 %v1150, %v1172
    %1174 = vdwg.mxu0
    %1175 = vst [vmem:[#allocation13] sm:$0x3] %v1173
    // Predicated region
    $region82: #{tpu_custom_call.1} parent=1 // pred_check
      _
    $region83: #{tpu_custom_call.1} parent=1 // pred_check_branch
      %1177 = sbr.rel (0) target = $region85
    $region84: #{tpu_custom_call.1} parent=1 // pred_region
      %1179 = vsyncadd [#allocation4], 0
      %s1181 = sshll.u32 [#allocation13], 4
      %s1182 = int_to_ptr.vmem [resolvable:$true] %s1181
      %s1183 = sshll.u32 %s14, 4
      %s1184 = int_to_ptr.hbm [resolvable:$true] %s1183
      %1186 = dma.vmem_to_hbm [thread:$0]  %s1182, 32, %s1184, [#allocation4]
    $region85: #{tpu_custom_call.1} parent=1 // pred_fallthru
      _
    // Predicated region
    $region86: #{tpu_custom_call.1} parent=1 // pred_check
      _
    $region87: #{tpu_custom_call.1} parent=1 // pred_check_branch
      %1188 = sbr.rel (0) target = $region89
    $region88: #{tpu_custom_call.1} parent=1 // pred_region
      %1190 = dma.done [#allocation4], 32
    $region89: #{tpu_custom_call.1} parent=1 // pred_fallthru
      _
    %1191 = vsyncpa [#allocation3], 1
    %1192 = vsyncpa [#allocation6], 1
    %1193 = vsyncpa [#allocation9], 1
    %1194 = vsyncpa [#allocation12], 1
    %1195 = vsyncpa [#allocation4], 1

</llo_original>
